<compile_context>
chip_gen: v6e
topology: v6e:2x2x1
jax: 0.10.0
libtpu: 0.0.40
codegen_flags: <defaults>
</compile_context>

<pallas_src>
import functools

import numpy as np
import jax
import jax.numpy as jnp
from jax.experimental import pallas as pl
from jax.experimental.pallas import tpu as pltpu


_PRECISION = jax.lax.Precision.HIGHEST   # f32 fidelity vs. the torch reference
_MAX_UNROLL = 16                         # cap on images per grid step (static unroll)


# ----------------------------------------------------------------------------
# Glue: affine matrix (Affy.get_matrix equivalent) + bicubic weight matrices
# ----------------------------------------------------------------------------
def get_matrix(angle, sx, sy, tx, ty, cx, cy):
    """Rotation/scale about (cx, cy) plus translation; 3x3 homogeneous."""
    ca, sa = np.cos(angle), np.sin(angle)
    a11, a12 = sx * ca, -sx * sa
    a21, a22 = sy * sa, sy * ca
    a13 = cx - a11 * cx - a12 * cy + tx
    a23 = cy - a21 * cx - a22 * cy + ty
    return np.array([[a11, a12, a13],
                     [a21, a22, a23],
                     [0.0, 0.0, 1.0]], dtype=np.float64)


def _cubic_weight(x, a=-0.75):
    """Bicubic convolution kernel (PyTorch/OpenCV convention, a = -0.75)."""
    x = jnp.abs(x)
    w1 = (a + 2.0) * x ** 3 - (a + 3.0) * x ** 2 + 1.0          # |x| <= 1
    w2 = a * x ** 3 - 5.0 * a * x ** 2 + 8.0 * a * x - 4.0 * a  # 1 < |x| < 2
    return jnp.where(x <= 1.0, w1, jnp.where(x < 2.0, w2, 0.0))


def build_interp_matrix(src_coords, size_in, bordermode):
    """Dense (size_out, size_in) bicubic interpolation matrix for 1-D coords."""
    src = jnp.asarray(src_coords, jnp.float32)
    size_out = src.shape[0]
    fl = jnp.floor(src)
    t = src - fl                                                 # fractional part
    # 4 taps at offsets -1, 0, +1, +2 relative to floor
    w = jnp.stack([_cubic_weight(1.0 + t),
                   _cubic_weight(t),
                   _cubic_weight(1.0 - t),
                   _cubic_weight(2.0 - t)], axis=-1)             # (out, 4)
    idx = fl[:, None].astype(jnp.int32) + jnp.arange(-1, 3)[None, :]  # (out, 4)
    if bordermode == "zeros":
        valid = (idx >= 0) & (idx < size_in)
        w = jnp.where(valid, w, 0.0)
    idx = jnp.clip(idx, 0, size_in - 1)   # replicate border: clipped taps add up
    rows = jnp.broadcast_to(jnp.arange(size_out)[:, None], idx.shape)
    mat = jnp.zeros((size_out, size_in), jnp.float32)
    return mat.at[rows, idx].add(w)                              # (out, in)


# ----------------------------------------------------------------------------
# Fused Pallas kernel: height pass + width pass for a group of images
# ----------------------------------------------------------------------------
def _fused_warp_kernel(x_ref, wy_ref, wxt_ref, o_ref, *, tg):
    # Weight matrices are resident across the whole grid (constant index_map).
    wy = wy_ref[...]     # (Hout, H)  f32
    wxt = wxt_ref[...]   # (W, Wout)  f32
    # Static unroll over the images of this block; every iteration is two
    # plain 2-D MXU matmuls with static indices (robust lowering, values die
    # at the o_ref[g] store so live ranges stay short).
    for g in range(tg):
        xg = x_ref[g].astype(jnp.float32)                         # (H, W)
        t = jnp.dot(wy, xg, preferred_element_type=jnp.float32,
                    precision=_PRECISION)                         # (Hout, W)
        yg = jnp.dot(t, wxt, preferred_element_type=jnp.float32,
                     precision=_PRECISION)                        # (Hout, Wout)
        o_ref[g] = yg.astype(o_ref.dtype)


def _vmem_capacity_bytes():
    """Generation-aware physical VMEM size (v5e/v6e 128 MiB, v7x 64 MiB)."""
    try:
        info = pltpu.get_tpu_info()
        cap = getattr(info, "vmem_capacity_bytes", None)
        if cap:
            return int(cap)
    except Exception:
        pass
    return 64 * 1024 * 1024   # v7x floor: safe lower bound on every generation


def _fused_warp(x3, wy, wxt):
    """x3: (NC, H, W) any float dtype; wy: (Hout, H) f32; wxt: (W, Wout) f32."""
    NC, H, W = x3.shape
    Hout = wy.shape[0]
    Wout = wxt.shape[1]
    itemsize = x3.dtype.itemsize          # output dtype == input dtype

    phys = _vmem_capacity_bytes()
    budget = int(phys * 0.55)             # leave pipeline/compiler headroom
    # Weights get double-buffered by the pipeline even though their index_map
    # is constant, so account for 2x.
    weight_bytes = 2 * 4 * (Hout * H + W * Wout)
    # One image in + one image out, double-buffered blocks.
    per_img = 2 * (H * W + Hout * Wout) * itemsize

    tg = max(1, (budget - weight_bytes) // per_img)   # VMEM-derived cap
    tg = int(min(tg, NC, _MAX_UNROLL))
    # Keep >= min(NC, 4) grid steps so v7x's two TensorCores both get work and
    # the DMA pipeline has iterations to overlap.
    tg = max(1, min(tg, NC // min(NC, 4)))
    num_blocks = pl.cdiv(NC, tg)          # ragged tail handled by Pallas

    need = weight_bytes + tg * per_img
    vmem_limit = int(min(phys, max(need + (4 << 20), 32 << 20)))

    kernel = functools.partial(_fused_warp_kernel, tg=tg)

    # TODO(synk): for very large H/W the dense (Hout,H)/(W,Wout) bicubic
    # matrices should be replaced by their 4-tap bands (scalar-prefetched
    # band offsets + K-tiling) to keep weight VMEM/MXU work O(4) per output.
    return pl.pallas_call(
        kernel,
        out_shape=jax.ShapeDtypeStruct((NC, Hout, Wout), x3.dtype),
        grid_spec=pltpu.PrefetchScalarGridSpec(
            num_scalar_prefetch=0,
            grid=(num_blocks,),
            in_specs=[
                pl.BlockSpec((tg, H, W), lambda i: (i, 0, 0)),
                pl.BlockSpec((Hout, H), lambda i: (0, 0)),    # resident weights
                pl.BlockSpec((W, Wout), lambda i: (0, 0)),    # resident weights
            ],
            out_specs=pl.BlockSpec((tg, Hout, Wout), lambda i: (i, 0, 0)),
        ),
        compiler_params=pltpu.CompilerParams(
            dimension_semantics=("parallel",),
            vmem_limit_bytes=vmem_limit),
        cost_estimate=pl.CostEstimate(
            flops=2 * NC * (Hout * H * W + Hout * W * Wout),
            transcendentals=0,
            bytes_accessed=(NC * H * W * itemsize
                            + NC * Hout * Wout * itemsize
                            + 4 * (Hout * H + W * Wout))),
    )(x3, wy, wxt)


# ----------------------------------------------------------------------------
# AffineModel forward (JAX wrapper)
# ----------------------------------------------------------------------------
def affine_model_forward(x, cx, cy, bordermode="replicate"):
    if x.ndim != 4:
        raise Exception("error")
    N, C, H, W = x.shape
    Wout, Hout = W, H                      # size = (x.shape[3], x.shape[2])

    M = get_matrix(0.0, 1.0, 1.0, 0.0, 0.0, cx, cy)   # identity for these args
    Minv = np.linalg.inv(M)                # dst -> src mapping for the warp

    # get_matrix(angle=0, ...) is axis-aligned, so the bicubic warp separates
    # into per-axis interpolation matrices.
    if abs(Minv[0, 1]) > 1e-8 or abs(Minv[1, 0]) > 1e-8:
        # TODO(synk): general rotated/sheared warps need a 2-D gather path.
        raise NotImplementedError("only axis-aligned affine supported")

    ox = jnp.arange(Wout, dtype=jnp.float32)
    oy = jnp.arange(Hout, dtype=jnp.float32)
    src_x = np.float32(Minv[0, 0]) * ox + np.float32(Minv[0, 2])
    src_y = np.float32(Minv[1, 1]) * oy + np.float32(Minv[1, 2])

    wy = build_interp_matrix(src_y, H, bordermode)    # (Hout, H)
    wxt = build_interp_matrix(src_x, W, bordermode).T  # (W, Wout)

    # Layout: only no-copy reshapes on the image tensor (no transposes, no
    # dtype upcast) -> exactly one HBM read of x and one HBM write of out.
    NC = N * C
    x3 = x.reshape(NC, H, W)
    out3 = _fused_warp(x3, wy, wxt)                   # (NC, Hout, Wout)
    return out3.reshape(N, C, Hout, Wout)


if __name__ == "__main__":
    key = jax.random.PRNGKey(0)
    N, C, H, W = 2, 4, 16, 16
    x = jax.random.normal(key, (N, C, H, W), dtype=jnp.float32)

    cx, cy = (W - 1) / 2.0, (H - 1) / 2.0
    out = affine_model_forward(x, cx, cy, bordermode="replicate")
    out = jax.block_until_ready(out)

    # With angle=0, scale=1, translation=0 the affine warp is the identity;
    # bicubic weights at zero fractional offset are [0, 1, 0, 0], so out == x.
    assert out.shape == (N, C, H, W)
    np.testing.assert_allclose(np.asarray(out), np.asarray(x),
                               rtol=1e-4, atol=1e-4)
    print("KERNEL_OK")
</pallas_src>

<mosaic_0001>
module attributes {stable_mosaic.version = 11 : i64} {
  func.func @_fused_warp_kernel(%arg0: i32, %arg1: memref<2x16x16xf32, #tpu.memory_space<vmem>>, %arg2: memref<16x16xf32, #tpu.memory_space<vmem>>, %arg3: memref<16x16xf32, #tpu.memory_space<vmem>>, %arg4: memref<2x16x16xf32, #tpu.memory_space<vmem>>) attributes {dimension_semantics = [#tpu.dimension_semantics<parallel>], iteration_bounds = array<i64: 4>, scalar_prefetch = 0 : i64, scratch_operands = 0 : i64, tpu.core_type = #tpu.core_type<tc>, window_params = [{transform_indices = @transform_0, window_bounds = array<i64: 2, 16, 16>}, {pipeline_mode = #tpu.pipeline_mode<synchronous>, transform_indices = @transform_1, window_bounds = array<i64: 16, 16>}, {pipeline_mode = #tpu.pipeline_mode<synchronous>, transform_indices = @transform_2, window_bounds = array<i64: 16, 16>}, {transform_indices = @transform_3, window_bounds = array<i64: 2, 16, 16>}]} {
    %c0 = arith.constant 0 : index
    %c0_0 = arith.constant 0 : index
    %0 = vector.load %arg2[%c0, %c0_0] : memref<16x16xf32, #tpu.memory_space<vmem>>, vector<16x16xf32>
    %c0_1 = arith.constant 0 : index
    %c0_2 = arith.constant 0 : index
    %1 = vector.load %arg3[%c0_1, %c0_2] : memref<16x16xf32, #tpu.memory_space<vmem>>, vector<16x16xf32>
    %c0_3 = arith.constant 0 : index
    %c0_4 = arith.constant 0 : index
    %c0_5 = arith.constant 0 : index
    %2 = vector.load %arg1[%c0_3, %c0_4, %c0_5] : memref<2x16x16xf32, #tpu.memory_space<vmem>>, vector<1x16x16xf32>
    %3 = vector.shape_cast %2 : vector<1x16x16xf32> to vector<16x16xf32>
    %cst = arith.constant dense<0.000000e+00> : vector<16x16xf32>
    %4 = tpu.matmul %0, %3, %cst {dimension_numbers = #tpu.dot_dimension_numbers<[1], [0], [0], [1], [0, 0, 1, 1], [], []>, precision = #tpu.contract_precision<fp32>} : vector<16x16xf32>, vector<16x16xf32>, vector<16x16xf32> -> vector<16x16xf32>
    %cst_6 = arith.constant dense<0.000000e+00> : vector<16x16xf32>
    %5 = tpu.matmul %4, %1, %cst_6 {dimension_numbers = #tpu.dot_dimension_numbers<[1], [0], [0], [1], [0, 0, 1, 1], [], []>, precision = #tpu.contract_precision<fp32>} : vector<16x16xf32>, vector<16x16xf32>, vector<16x16xf32> -> vector<16x16xf32>
    %c0_7 = arith.constant 0 : index
    %c0_8 = arith.constant 0 : index
    %c0_9 = arith.constant 0 : index
    %6 = vector.load %arg4[%c0_7, %c0_8, %c0_9] : memref<2x16x16xf32, #tpu.memory_space<vmem>>, vector<1x16x16xf32>
    %7 = vector.shape_cast %6 : vector<1x16x16xf32> to vector<16x16xf32>
    %8 = vector.shape_cast %5 : vector<16x16xf32> to vector<1x16x16xf32>
    tpu.vector_store %arg4[%c0_7, %c0_8, %c0_9], %8 {strides = array<i32>} : memref<2x16x16xf32, #tpu.memory_space<vmem>>, vector<1x16x16xf32>,
    %c1 = arith.constant 1 : index
    %c0_10 = arith.constant 0 : index
    %c0_11 = arith.constant 0 : index
    %9 = vector.load %arg1[%c1, %c0_10, %c0_11] : memref<2x16x16xf32, #tpu.memory_space<vmem>>, vector<1x16x16xf32>
    %10 = vector.shape_cast %9 : vector<1x16x16xf32> to vector<16x16xf32>
    %cst_12 = arith.constant dense<0.000000e+00> : vector<16x16xf32>
    %11 = tpu.matmul %0, %10, %cst_12 {dimension_numbers = #tpu.dot_dimension_numbers<[1], [0], [0], [1], [0, 0, 1, 1], [], []>, precision = #tpu.contract_precision<fp32>} : vector<16x16xf32>, vector<16x16xf32>, vector<16x16xf32> -> vector<16x16xf32>
    %cst_13 = arith.constant dense<0.000000e+00> : vector<16x16xf32>
    %12 = tpu.matmul %11, %1, %cst_13 {dimension_numbers = #tpu.dot_dimension_numbers<[1], [0], [0], [1], [0, 0, 1, 1], [], []>, precision = #tpu.contract_precision<fp32>} : vector<16x16xf32>, vector<16x16xf32>, vector<16x16xf32> -> vector<16x16xf32>
    %c1_14 = arith.constant 1 : index
    %c0_15 = arith.constant 0 : index
    %c0_16 = arith.constant 0 : index
    %13 = vector.load %arg4[%c1_14, %c0_15, %c0_16] : memref<2x16x16xf32, #tpu.memory_space<vmem>>, vector<1x16x16xf32>
    %14 = vector.shape_cast %13 : vector<1x16x16xf32> to vector<16x16xf32>
    %15 = vector.shape_cast %12 : vector<16x16xf32> to vector<1x16x16xf32>
    tpu.vector_store %arg4[%c1_14, %c0_15, %c0_16], %15 {strides = array<i32>} : memref<2x16x16xf32, #tpu.memory_space<vmem>>, vector<1x16x16xf32>,
    return
  }
  func.func @transform_0(%arg0: i32) -> (i32, i32, i32) {
    %c0_i32 = arith.constant 0 : i32
    %c0_i32_0 = arith.constant 0 : i32
    %c0_i32_1 = arith.constant 0 : i32
    return %arg0, %c0_i32, %c0_i32_0 : i32, i32, i32
  }
  func.func @transform_1(%arg0: i32) -> (i32, i32) {
    %c0_i32 = arith.constant 0 : i32
    %c0_i32_0 = arith.constant 0 : i32
    %c0_i32_1 = arith.constant 0 : i32
    return %c0_i32, %c0_i32_0 : i32, i32
  }
  func.func @transform_2(%arg0: i32) -> (i32, i32) {
    %c0_i32 = arith.constant 0 : i32
    %c0_i32_0 = arith.constant 0 : i32
    %c0_i32_1 = arith.constant 0 : i32
    return %c0_i32, %c0_i32_0 : i32, i32
  }
  func.func @transform_3(%arg0: i32) -> (i32, i32, i32) {
    %c0_i32 = arith.constant 0 : i32
    %c0_i32_0 = arith.constant 0 : i32
    %c0_i32_1 = arith.constant 0 : i32
    return %arg0, %c0_i32, %c0_i32_0 : i32, i32, i32
  }
}

</mosaic_0001>

<llo_original>
// kernel: tpu_custom_call.1
$region0: #{tpu_custom_call.1}
  #allocation0 [shape = 'u32[]', space=smem, size = 0x4, offset = 0x4, fixed_abs, tag = 'smem constant byte address 0x4 - core index']
  #allocation1 [shape = 'u32[144,128]{1,0:T(1,128)}', space=vmem, size = 0x12000, scoped, tag = 'internal scratch']
  %s0 = inlined_call_operand.hbm [shape: f32[8,16,16], index: 0, kind: input, shape index: {}]
  %s1 = inlined_call_operand.hbm [shape: f32[16,16], index: 1, kind: input, shape index: {}]
  %s2 = inlined_call_operand.hbm [shape: f32[16,16], index: 2, kind: input, shape index: {}]
  %s3 = inlined_call_operand.hbm [shape: f32[8,16,16], index: 3, kind: output, shape index: {}]
  %s4 = sld [smem:[#allocation0]]
  $region57: #{tpu_custom_call.1} parent=0
    _
  %s6 = ssub.s32 1, %s4
  %s7 = scalar_select 0, %s6, %s4
  $region1: #{tpu_custom_call.1} parent=0
    #allocation2 [shape = 'u8[32768]{0}', space=vmem, size = 0x8000, scoped, tag = 'input window, operand 0']
    #allocation3 [shape = 's32[2]{0}', space=sflag, size = 0x8, scoped, tag = 'scoped memory for tpu_custom_call.1']
    #allocation4 [shape = 's32[2]{0}', space=sflag, size = 0x8, scoped, tag = 'scoped memory for tpu_custom_call.1']
    #allocation5 [shape = 'u8[8192]{0}', space=vmem, size = 0x2000, scoped, tag = 'input window, operand 1, single buffered']
    #allocation6 [shape = 's32[1]{0}', space=sflag, size = 0x4, scoped, tag = 'scoped memory for tpu_custom_call.1']
    #allocation7 [shape = 'u8[8192]{0}', space=vmem, size = 0x2000, scoped, tag = 'input window, operand 2, single buffered']
    #allocation8 [shape = 'u8[32768]{0}', space=vmem, size = 0x8000, scoped, tag = 'output window, operand 0']
    %8 = vsyncpa [#allocation3], 0
    %s9 = scalar_lea.sflag [#allocation3], 1
    %10 = vsyncpa %s9, 0
    %11 = vsyncpa [#allocation6], 0
    %12 = vsyncpa [#allocation4], 0
    %s13 = scalar_lea.sflag [#allocation4], 1
    %14 = vsyncpa %s13, 0
    loop: start=0, step=1, limit=6
    $region2: #{tpu_custom_call.1} parent=1 // loop_pre_header
      _
    $region3: #{tpu_custom_call.1} parent=1 // loop_header
      %s16 = sphi 0, %s20
      %p17 = scmp.ge.s32.totalorder %s16, 6
      %s26 = sphi 0, %s28
      %s29 = sphi 0, %s26
      %s30 = sphi 0, %s29
      %s46 = sphi 0, %s30
      %s50 = sphi 0, %s50
      %s52 = sphi 0, %s50
      %s53 = sphi 0, %s52
      %s67 = sphi 0, %s53
      %s71 = sphi 0, %s71
      %s73 = sphi 0, %s71
      %s74 = sphi 0, %s73
      %s88 = sphi 0, %s74
      %s94 = sphi 0, %s96
      %s97 = sphi 0, %s94
      %s98 = sphi 0, %s97
      %s114 = sphi 0, %s98
    $region4: #{tpu_custom_call.1} parent=1 // loop_header_branch
      %19 = sbr.rel (%p17) target = $region8
    $region5: #{tpu_custom_call.1} parent=1 // loop_body
      %s21 = ssub.s32 %s16, 1
      %s22 = ssub.s32 %s16, 2
      %s23 = sadd.s32 %s16, 1
      %s24 = ssub.s32 %s16, %s23
      %p25 = scmp.eq.s32.totalorder %s24, 0
      %s27 = sadd.s32 %s26, 1
      %s28 = scalar_select %p25, %s26, %s27
      %p31 = pneg %p25
      %p32 = scmp.eq.s32.totalorder %s16, 3
      %p33 = por %p31, %p32
      %p34 = scmp.ne.s32.totalorder %s26, %s29
      %p35 = scmp.eq.s32.totalorder %s16, 0
      %p36 = por %p34, %p35
      %p37 = scmp.ne.s32.totalorder %s26, %s29
      %p38 = scmp.eq.s32.totalorder %s21, 3
      %p39 = por %p37, %p38
      %p40 = scmp.ne.s32.totalorder %s29, %s30
      %p41 = scmp.eq.s32.totalorder %s21, 0
      %p42 = por %p40, %p41
      %p43 = scmp.ne.s32.totalorder %s29, %s30
      %p44 = scmp.eq.s32.totalorder %s22, 3
      %p45 = por %p43, %p44
      %p47 = scmp.ne.s32.totalorder %s30, %s46
      %p48 = scmp.eq.s32.totalorder %s22, 0
      %p49 = por %p47, %p48
      %s51 = sadd.s32 %s50, 1
      %p54 = scmp.eq.s32.totalorder %s16, 3
      %p55 = scmp.ne.s32.totalorder %s50, %s52
      %p56 = scmp.eq.s32.totalorder %s16, 0
      %p57 = por %p55, %p56
      %p58 = scmp.ne.s32.totalorder %s50, %s52
      %p59 = scmp.eq.s32.totalorder %s21, 3
      %p60 = por %p58, %p59
      %p61 = scmp.ne.s32.totalorder %s52, %s53
      %p62 = scmp.eq.s32.totalorder %s21, 0
      %p63 = por %p61, %p62
      %p64 = scmp.ne.s32.totalorder %s52, %s53
      %p65 = scmp.eq.s32.totalorder %s22, 3
      %p66 = por %p64, %p65
      %p68 = scmp.ne.s32.totalorder %s53, %s67
      %p69 = scmp.eq.s32.totalorder %s22, 0
      %p70 = por %p68, %p69
      %s72 = sadd.s32 %s71, 1
      %p75 = scmp.eq.s32.totalorder %s16, 3
      %p76 = scmp.ne.s32.totalorder %s71, %s73
      %p77 = scmp.eq.s32.totalorder %s16, 0
      %p78 = por %p76, %p77
      %p79 = scmp.ne.s32.totalorder %s71, %s73
      %p80 = scmp.eq.s32.totalorder %s21, 3
      %p81 = por %p79, %p80
      %p82 = scmp.ne.s32.totalorder %s73, %s74
      %p83 = scmp.eq.s32.totalorder %s21, 0
      %p84 = por %p82, %p83
      %p85 = scmp.ne.s32.totalorder %s73, %s74
      %p86 = scmp.eq.s32.totalorder %s22, 3
      %p87 = por %p85, %p86
      %p89 = scmp.ne.s32.totalorder %s74, %s88
      %p90 = scmp.eq.s32.totalorder %s22, 0
      %p91 = por %p89, %p90
      %s92 = ssub.s32 %s16, %s23
      %p93 = scmp.eq.s32.totalorder %s92, 0
      %s95 = sadd.s32 %s94, 1
      %s96 = scalar_select %p93, %s94, %s95
      %p99 = pneg %p93
      %p100 = scmp.eq.s32.totalorder %s16, 3
      %p101 = por %p99, %p100
      %p102 = scmp.ne.s32.totalorder %s94, %s97
      %p103 = scmp.eq.s32.totalorder %s16, 0
      %p104 = por %p102, %p103
      %p105 = scmp.ne.s32.totalorder %s94, %s97
      %p106 = scmp.eq.s32.totalorder %s21, 3
      %p107 = por %p105, %p106
      %p108 = scmp.ne.s32.totalorder %s97, %s98
      %p109 = scmp.eq.s32.totalorder %s21, 0
      %p110 = por %p108, %p109
      %p111 = scmp.ne.s32.totalorder %s97, %s98
      %p112 = scmp.eq.s32.totalorder %s22, 3
      %p113 = por %p111, %p112
      %p115 = scmp.ne.s32.totalorder %s98, %s114
      %p116 = scmp.eq.s32.totalorder %s22, 0
      %p117 = por %p115, %p116
      %p118 = scmp.le.s32.totalorder 1, %s16
      %p119 = scmp.lt.s32.totalorder %s16, 5
      %p120 = pnand %p118, %p119
      %p121 = pneg %p120
      // Predicated region
      $region9: #{tpu_custom_call.1} parent=5 // pred_check
        _
      $region10: #{tpu_custom_call.1} parent=5 // pred_check_branch
        %123 = sbr.rel (%p120) target = $region12
      $region11: #{tpu_custom_call.1} parent=5 // pred_region
        %s124 = ssub.s32 %s16, 1
        // Predicated region
        $region13: #{tpu_custom_call.1} parent=11 // pred_check
          %p125 = pneg %p63
        $region14: #{tpu_custom_call.1} parent=11 // pred_check_branch
          %127 = sbr.rel (%p125) target = $region16
        $region15: #{tpu_custom_call.1} parent=11 // pred_region
          %s129 = ssub.s32 256, 256
          %130 = vsyncadd [#allocation6], %s129
          %s131 = sshll.u32 [#allocation5], 4
          %s132 = int_to_ptr.vmem [resolvable:$true] %s131
          %137 = dma.hbm_to_vmem [thread:$0]  %s1, 256, %s132, [#allocation6], 128, 128, 8
        $region16: #{tpu_custom_call.1} parent=11 // pred_fallthru
          _
        // Predicated region
        $region17: #{tpu_custom_call.1} parent=11 // pred_check
          %p138 = pneg %p84
        $region18: #{tpu_custom_call.1} parent=11 // pred_check_branch
          %140 = sbr.rel (%p138) target = $region20
        $region19: #{tpu_custom_call.1} parent=11 // pred_region
          %s142 = ssub.s32 256, 256
          %143 = vsyncadd [#allocation6], %s142
          %s144 = sshll.u32 [#allocation7], 4
          %s145 = int_to_ptr.vmem [resolvable:$true] %s144
          %150 = dma.hbm_to_vmem [thread:$0]  %s2, 256, %s145, [#allocation6], 128, 128, 8
        $region20: #{tpu_custom_call.1} parent=11 // pred_fallthru
          _
      $region12: #{tpu_custom_call.1} parent=5 // pred_fallthru
        _
      %p151 = scmp.lt.s32.totalorder %s16, 4
      // Predicated region
      $region21: #{tpu_custom_call.1} parent=5 // pred_check
        %p152 = pneg %p151
      $region22: #{tpu_custom_call.1} parent=5 // pred_check_branch
        %154 = sbr.rel (%p152) target = $region24
      $region23: #{tpu_custom_call.1} parent=5 // pred_region
        // Predicated region
        $region25: #{tpu_custom_call.1} parent=23 // pred_check
          %p155 = pneg %p36
        $region26: #{tpu_custom_call.1} parent=23 // pred_check_branch
          %157 = sbr.rel (%p155) target = $region28
        $region27: #{tpu_custom_call.1} parent=23 // pred_region
          %s158 = sand.u32 %s26, 1
          %s159 = scalar_lea.sflag [#allocation3], %s158
          %s160 = sand.u32 %s26, 1
          %s161 = smul.addr %s160, 32
          %s162 = scalar_lea.vmem [#allocation2], %s161
          %s163 = smul.u32 2, %s16
          %s165 = ssub.s32 512, 512
          %166 = vsyncadd %s159, %s165
          %s167 = smul.addr %s163, 2
          %s168 = smul.addr %s167, 128
          %s169 = scalar_lea.hbm %s0, %s168
          %s170 = sshll.u32 %s162, 4
          %s171 = int_to_ptr.vmem [resolvable:$true] %s170
          %176 = dma.hbm_to_vmem [thread:$0]  %s169, 512, %s171, %s159, 128, 128, 8
        $region28: #{tpu_custom_call.1} parent=23 // pred_fallthru
          _
      $region24: #{tpu_custom_call.1} parent=5 // pred_fallthru
        _
      %p177 = scmp.le.s32.totalorder 1, %s16
      %p178 = scmp.lt.s32.totalorder %s16, 5
      %p179 = pnand %p177, %p178
      %p180 = pneg %p179
      // Predicated region
      $region29: #{tpu_custom_call.1} parent=5 // pred_check
        _
      $region30: #{tpu_custom_call.1} parent=5 // pred_check_branch
        %182 = sbr.rel (%p179) target = $region32
      $region31: #{tpu_custom_call.1} parent=5 // pred_region
        %s183 = ssub.s32 %s16, 1
        %s184 = sand.u32 %s29, 1
        %s185 = scalar_lea.sflag [#allocation3], %s184
        %s186 = sand.u32 %s29, 1
        %s187 = smul.addr %s186, 32
        %s188 = scalar_lea.vmem [#allocation2], %s187
        // Predicated region
        $region33: #{tpu_custom_call.1} parent=31 // pred_check
          %p189 = pneg %p42
        $region34: #{tpu_custom_call.1} parent=31 // pred_check_branch
          %191 = sbr.rel (%p189) target = $region36
        $region35: #{tpu_custom_call.1} parent=31 // pred_region
          %192 = dma.done %s185, 512
        $region36: #{tpu_custom_call.1} parent=31 // pred_fallthru
          _
        // Predicated region
        $region37: #{tpu_custom_call.1} parent=31 // pred_check
          %p193 = pneg %p63
        $region38: #{tpu_custom_call.1} parent=31 // pred_check_branch
          %195 = sbr.rel (%p193) target = $region40
        $region39: #{tpu_custom_call.1} parent=31 // pred_region
          %196 = dma.done [#allocation6], 256
        $region40: #{tpu_custom_call.1} parent=31 // pred_fallthru
          _
        // Predicated region
        $region41: #{tpu_custom_call.1} parent=31 // pred_check
          %p197 = pneg %p84
        $region42: #{tpu_custom_call.1} parent=31 // pred_check_branch
          %199 = sbr.rel (%p197) target = $region44
        $region43: #{tpu_custom_call.1} parent=31 // pred_region
          %200 = dma.done [#allocation6], 256
        $region44: #{tpu_custom_call.1} parent=31 // pred_fallthru
          _
        %s201 = sand.u32 %s29, 1
        %s202 = scalar_lea.sflag [#allocation3], %s201
        %s203 = sand.u32 %s29, 1
        %s204 = smul.addr %s203, 32
        %s205 = scalar_lea.vmem [#allocation2], %s204
        %p206 = pneg %p42
        %p207 = pneg %p39
        %p208 = pneg %p63
        %p209 = pneg %p60
        %p210 = pneg %p84
        %p211 = pneg %p81
        %p212 = pneg %p110
        %p213 = pneg %p107
        %s214 = sand.u32 %s97, 1
        %s215 = scalar_lea.sflag [#allocation4], %s214
        %s216 = sand.u32 %s97, 1
        %s217 = smul.addr %s216, 32
        %s218 = scalar_lea.vmem [#allocation8], %s217
        %s219 = smul.u32 2, %s21
        %s220 = smul.u32 2, %s21
        %v221 = vld [vmem:[#allocation5] sm:$0xff]
        %v222 = vld [vmem:[#allocation5 + $0x8] sm:$0xff]
        %v223 = vld [vmem:[#allocation7] sm:$0xff]
        %v224 = vld [vmem:[#allocation7 + $0x8] sm:$0xff]
        %v225 = vld [vmem:[%s188] sm:$0xff]
        %v226 = vld [vmem:[%s188 + $0x8] sm:$0xff]
        %vm227 = vcmask 130048
        %v229 = vsel %vm227, %v221, 0
        %v232 = vsel %vm227, %v222, 0
        %234 = vmatprep.subr.mxu0 0.0
        %235 = vmatpush1.msra.mxu0 0.0
        %236 = vmatprep.subr.mxu0 0.0
        %237 = vmatpush1.msra.mxu0 0.0
        %238 = vmatprep.subr.mxu0 0.0
        %239 = vmatpush1.msra.mxu0 0.0
        %240 = vmatprep.subr.mxu0 0.0
        %241 = vmatpush1.msra.mxu0 0.0
        %242 = vmatprep.subr.mxu0 0.0
        %243 = vmatpush1.msra.mxu0 0.0
        %244 = vmatprep.subr.mxu0 0.0
        %245 = vmatpush1.msra.mxu0 0.0
        %246 = vmatprep.subr.mxu0 0.0
        %247 = vmatpush1.msra.mxu0 0.0
        %248 = vmatprep.subr.mxu0 0.0
        %249 = vmatpush1.msra.mxu0 0.0
        %250 = vmatprep.subr.mxu0 0.0
        %251 = vmatpush1.msra.mxu0 0.0
        %252 = vmatprep.subr.mxu0 0.0
        %253 = vmatpush1.msra.mxu0 0.0
        %254 = vmatprep.subr.mxu0 0.0
        %255 = vmatpush1.msra.mxu0 0.0
        %256 = vmatprep.subr.mxu0 0.0
        %257 = vmatpush1.msra.mxu0 0.0
        %258 = vmatprep.subr.mxu0 0.0
        %259 = vmatpush1.msra.mxu0 0.0
        %260 = vmatprep.subr.mxu0 0.0
        %261 = vmatpush1.msra.mxu0 0.0
        %262 = vmatprep.subr.mxu0 0.0
        %v263 = vand.u32 %v226, 4294901760
        %264 = vmatpush1.msra.mxu0 %v263
        %265 = vmatprep.subr.mxu0 0.0
        %v266 = vand.u32 %v225, 4294901760
        %267 = vmatpush1.msra.mxu0 %v266
        %268 = vmatprep.subr.mxu0 0.0
        %269 = vmatpush2.msra.mxu0 0.0
        %270 = vmatprep.subr.mxu0 0.0
        %271 = vmatpush2.msra.mxu0 0.0
        %272 = vmatprep.subr.mxu0 0.0
        %273 = vmatpush2.msra.mxu0 0.0
        %274 = vmatprep.subr.mxu0 0.0
        %275 = vmatpush2.msra.mxu0 0.0
        %276 = vmatprep.subr.mxu0 0.0
        %277 = vmatpush2.msra.mxu0 0.0
        %278 = vmatprep.subr.mxu0 0.0
        %279 = vmatpush2.msra.mxu0 0.0
        %280 = vmatprep.subr.mxu0 0.0
        %281 = vmatpush2.msra.mxu0 0.0
        %282 = vmatprep.subr.mxu0 0.0
        %283 = vmatpush2.msra.mxu0 0.0
        %284 = vmatprep.subr.mxu0 0.0
        %285 = vmatpush2.msra.mxu0 0.0
        %286 = vmatprep.subr.mxu0 0.0
        %287 = vmatpush2.msra.mxu0 0.0
        %288 = vmatprep.subr.mxu0 0.0
        %289 = vmatpush2.msra.mxu0 0.0
        %290 = vmatprep.subr.mxu0 0.0
        %291 = vmatpush2.msra.mxu0 0.0
        %292 = vmatprep.subr.mxu0 0.0
        %293 = vmatpush2.msra.mxu0 0.0
        %294 = vmatprep.subr.mxu0 0.0
        %295 = vmatpush2.msra.mxu0 0.0
        %296 = vmatprep.subr.mxu0 0.0
        %297 = vmatpush2.msra.mxu0 0.0
        %298 = vmatprep.subr.mxu0 0.0
        %299 = vmatpush2.msra.mxu0 0.0
        %300 = vmatprep.mubr.f32.mxu0 0.0
        %v301 = vand.u32 %v229, 4294901760
        %v302 = vsub.f32 %v229, %v301
        %v303 = vand.u32 %v302, 4294901760
        %v304 = vsub.f32 %v302, %v303
        %v305 = vand.u32 %v304, 4294901760
        %306 = vmatmul.mubr.f32.gmra.mxu0 %v305
        %v307 = vpop.f32.mrf.mxu0
        %v308 = vadd.f32 0.0, %v307
        %v309 = vpop.f32.mrf.mxu0
        %310 = vmatprep.mubr.f32.mxu0 0.0
        %v311 = vand.u32 %v232, 4294901760
        %v312 = vsub.f32 %v232, %v311
        %v313 = vand.u32 %v312, 4294901760
        %v314 = vsub.f32 %v312, %v313
        %v315 = vand.u32 %v314, 4294901760
        %316 = vmatmul.mubr.f32.gmra.mxu0 %v315
        %v317 = vpop.f32.mrf.mxu0
        %v318 = vadd.f32 0.0, %v317
        %v319 = vpop.f32.mrf.mxu0
        %320 = vdwg.mxu0
        %321 = vmatprep.subr.mxu0 0.0
        %322 = vmatpush1.msra.mxu0 0.0
        %323 = vmatprep.subr.mxu0 0.0
        %324 = vmatpush1.msra.mxu0 0.0
        %325 = vmatprep.subr.mxu0 0.0
        %326 = vmatpush1.msra.mxu0 0.0
        %327 = vmatprep.subr.mxu0 0.0
        %328 = vmatpush1.msra.mxu0 0.0
        %329 = vmatprep.subr.mxu0 0.0
        %330 = vmatpush1.msra.mxu0 0.0
        %331 = vmatprep.subr.mxu0 0.0
        %332 = vmatpush1.msra.mxu0 0.0
        %333 = vmatprep.subr.mxu0 0.0
        %334 = vmatpush1.msra.mxu0 0.0
        %335 = vmatprep.subr.mxu0 0.0
        %336 = vmatpush1.msra.mxu0 0.0
        %337 = vmatprep.subr.mxu0 0.0
        %338 = vmatpush1.msra.mxu0 0.0
        %339 = vmatprep.subr.mxu0 0.0
        %340 = vmatpush1.msra.mxu0 0.0
        %341 = vmatprep.subr.mxu0 0.0
        %342 = vmatpush1.msra.mxu0 0.0
        %343 = vmatprep.subr.mxu0 0.0
        %344 = vmatpush1.msra.mxu0 0.0
        %345 = vmatprep.subr.mxu0 0.0
        %346 = vmatpush1.msra.mxu0 0.0
        %347 = vmatprep.subr.mxu0 0.0
        %348 = vmatpush1.msra.mxu0 0.0
        %349 = vmatprep.subr.mxu0 0.0
        %v350 = vand.u32 %v226, 4294901760
        %v351 = vsub.f32 %v226, %v350
        %v352 = vand.u32 %v351, 4294901760
        %v353 = vsub.f32 %v351, %v352
        %v354 = vand.u32 %v353, 4294901760
        %355 = vmatpush1.msra.mxu0 %v354
        %356 = vmatprep.subr.mxu0 0.0
        %v357 = vand.u32 %v225, 4294901760
        %v358 = vsub.f32 %v225, %v357
        %v359 = vand.u32 %v358, 4294901760
        %v360 = vsub.f32 %v358, %v359
        %v361 = vand.u32 %v360, 4294901760
        %362 = vmatpush1.msra.mxu0 %v361
        %363 = vmatprep.subr.mxu0 0.0
        %364 = vmatpush2.msra.mxu0 0.0
        %365 = vmatprep.subr.mxu0 0.0
        %366 = vmatpush2.msra.mxu0 0.0
        %367 = vmatprep.subr.mxu0 0.0
        %368 = vmatpush2.msra.mxu0 0.0
        %369 = vmatprep.subr.mxu0 0.0
        %370 = vmatpush2.msra.mxu0 0.0
        %371 = vmatprep.subr.mxu0 0.0
        %372 = vmatpush2.msra.mxu0 0.0
        %373 = vmatprep.subr.mxu0 0.0
        %374 = vmatpush2.msra.mxu0 0.0
        %375 = vmatprep.subr.mxu0 0.0
        %376 = vmatpush2.msra.mxu0 0.0
        %377 = vmatprep.subr.mxu0 0.0
        %378 = vmatpush2.msra.mxu0 0.0
        %379 = vmatprep.subr.mxu0 0.0
        %380 = vmatpush2.msra.mxu0 0.0
        %381 = vmatprep.subr.mxu0 0.0
        %382 = vmatpush2.msra.mxu0 0.0
        %383 = vmatprep.subr.mxu0 0.0
        %384 = vmatpush2.msra.mxu0 0.0
        %385 = vmatprep.subr.mxu0 0.0
        %386 = vmatpush2.msra.mxu0 0.0
        %387 = vmatprep.subr.mxu0 0.0
        %388 = vmatpush2.msra.mxu0 0.0
        %389 = vmatprep.subr.mxu0 0.0
        %390 = vmatpush2.msra.mxu0 0.0
        %391 = vmatprep.subr.mxu0 0.0
        %392 = vmatpush2.msra.mxu0 0.0
        %393 = vmatprep.subr.mxu0 0.0
        %394 = vmatpush2.msra.mxu0 0.0
        %395 = vmatprep.mubr.f32.mxu0 0.0
        %v396 = vand.u32 %v229, 4294901760
        %397 = vmatmul.mubr.f32.gmra.mxu0 %v396
        %v398 = vpop.f32.mrf.mxu0
        %v399 = vadd.f32 %v308, %v398
        %v400 = vpop.f32.mrf.mxu0
        %401 = vmatprep.mubr.f32.mxu0 0.0
        %v402 = vand.u32 %v232, 4294901760
        %403 = vmatmul.mubr.f32.gmra.mxu0 %v402
        %v404 = vpop.f32.mrf.mxu0
        %v405 = vadd.f32 %v318, %v404
        %v406 = vpop.f32.mrf.mxu0
        %407 = vdwg.mxu0
        %408 = vmatprep.subr.mxu0 0.0
        %409 = vmatpush1.msra.mxu0 0.0
        %410 = vmatprep.subr.mxu0 0.0
        %411 = vmatpush1.msra.mxu0 0.0
        %412 = vmatprep.subr.mxu0 0.0
        %413 = vmatpush1.msra.mxu0 0.0
        %414 = vmatprep.subr.mxu0 0.0
        %415 = vmatpush1.msra.mxu0 0.0
        %416 = vmatprep.subr.mxu0 0.0
        %417 = vmatpush1.msra.mxu0 0.0
        %418 = vmatprep.subr.mxu0 0.0
        %419 = vmatpush1.msra.mxu0 0.0
        %420 = vmatprep.subr.mxu0 0.0
        %421 = vmatpush1.msra.mxu0 0.0
        %422 = vmatprep.subr.mxu0 0.0
        %423 = vmatpush1.msra.mxu0 0.0
        %424 = vmatprep.subr.mxu0 0.0
        %425 = vmatpush1.msra.mxu0 0.0
        %426 = vmatprep.subr.mxu0 0.0
        %427 = vmatpush1.msra.mxu0 0.0
        %428 = vmatprep.subr.mxu0 0.0
        %429 = vmatpush1.msra.mxu0 0.0
        %430 = vmatprep.subr.mxu0 0.0
        %431 = vmatpush1.msra.mxu0 0.0
        %432 = vmatprep.subr.mxu0 0.0
        %433 = vmatpush1.msra.mxu0 0.0
        %434 = vmatprep.subr.mxu0 0.0
        %435 = vmatpush1.msra.mxu0 0.0
        %436 = vmatprep.subr.mxu0 0.0
        %v437 = vand.u32 %v226, 4294901760
        %v438 = vsub.f32 %v226, %v437
        %439 = vmatpush1.msra.mxu0 %v438
        %440 = vmatprep.subr.mxu0 0.0
        %v441 = vand.u32 %v225, 4294901760
        %v442 = vsub.f32 %v225, %v441
        %443 = vmatpush1.msra.mxu0 %v442
        %444 = vmatprep.subr.mxu0 0.0
        %445 = vmatpush2.msra.mxu0 0.0
        %446 = vmatprep.subr.mxu0 0.0
        %447 = vmatpush2.msra.mxu0 0.0
        %448 = vmatprep.subr.mxu0 0.0
        %449 = vmatpush2.msra.mxu0 0.0
        %450 = vmatprep.subr.mxu0 0.0
        %451 = vmatpush2.msra.mxu0 0.0
        %452 = vmatprep.subr.mxu0 0.0
        %453 = vmatpush2.msra.mxu0 0.0
        %454 = vmatprep.subr.mxu0 0.0
        %455 = vmatpush2.msra.mxu0 0.0
        %456 = vmatprep.subr.mxu0 0.0
        %457 = vmatpush2.msra.mxu0 0.0
        %458 = vmatprep.subr.mxu0 0.0
        %459 = vmatpush2.msra.mxu0 0.0
        %460 = vmatprep.subr.mxu0 0.0
        %461 = vmatpush2.msra.mxu0 0.0
        %462 = vmatprep.subr.mxu0 0.0
        %463 = vmatpush2.msra.mxu0 0.0
        %464 = vmatprep.subr.mxu0 0.0
        %465 = vmatpush2.msra.mxu0 0.0
        %466 = vmatprep.subr.mxu0 0.0
        %467 = vmatpush2.msra.mxu0 0.0
        %468 = vmatprep.subr.mxu0 0.0
        %469 = vmatpush2.msra.mxu0 0.0
        %470 = vmatprep.subr.mxu0 0.0
        %471 = vmatpush2.msra.mxu0 0.0
        %472 = vmatprep.subr.mxu0 0.0
        %473 = vmatpush2.msra.mxu0 0.0
        %474 = vmatprep.subr.mxu0 0.0
        %475 = vmatpush2.msra.mxu0 0.0
        %476 = vmatprep.mubr.f32.mxu0 0.0
        %v477 = vand.u32 %v229, 4294901760
        %v478 = vsub.f32 %v229, %v477
        %479 = vmatmul.mubr.f32.gmra.mxu0 %v478
        %v480 = vpop.f32.mrf.mxu0
        %v481 = vadd.f32 %v399, %v480
        %v482 = vpop.f32.mrf.mxu0
        %483 = vmatprep.mubr.f32.mxu0 0.0
        %v484 = vand.u32 %v232, 4294901760
        %v485 = vsub.f32 %v232, %v484
        %486 = vmatmul.mubr.f32.gmra.mxu0 %v485
        %v487 = vpop.f32.mrf.mxu0
        %v488 = vadd.f32 %v405, %v487
        %v489 = vpop.f32.mrf.mxu0
        %490 = vdwg.mxu0
        %491 = vmatprep.subr.mxu0 0.0
        %492 = vmatpush1.msra.mxu0 0.0
        %493 = vmatprep.subr.mxu0 0.0
        %494 = vmatpush1.msra.mxu0 0.0
        %495 = vmatprep.subr.mxu0 0.0
        %496 = vmatpush1.msra.mxu0 0.0
        %497 = vmatprep.subr.mxu0 0.0
        %498 = vmatpush1.msra.mxu0 0.0
        %499 = vmatprep.subr.mxu0 0.0
        %500 = vmatpush1.msra.mxu0 0.0
        %501 = vmatprep.subr.mxu0 0.0
        %502 = vmatpush1.msra.mxu0 0.0
        %503 = vmatprep.subr.mxu0 0.0
        %504 = vmatpush1.msra.mxu0 0.0
        %505 = vmatprep.subr.mxu0 0.0
        %506 = vmatpush1.msra.mxu0 0.0
        %507 = vmatprep.subr.mxu0 0.0
        %508 = vmatpush1.msra.mxu0 0.0
        %509 = vmatprep.subr.mxu0 0.0
        %510 = vmatpush1.msra.mxu0 0.0
        %511 = vmatprep.subr.mxu0 0.0
        %512 = vmatpush1.msra.mxu0 0.0
        %513 = vmatprep.subr.mxu0 0.0
        %514 = vmatpush1.msra.mxu0 0.0
        %515 = vmatprep.subr.mxu0 0.0
        %516 = vmatpush1.msra.mxu0 0.0
        %517 = vmatprep.subr.mxu0 0.0
        %518 = vmatpush1.msra.mxu0 0.0
        %519 = vmatprep.subr.mxu0 0.0
        %v520 = vand.u32 %v226, 4294901760
        %521 = vmatpush1.msra.mxu0 %v520
        %522 = vmatprep.subr.mxu0 0.0
        %v523 = vand.u32 %v225, 4294901760
        %524 = vmatpush1.msra.mxu0 %v523
        %525 = vmatprep.subr.mxu0 0.0
        %526 = vmatpush2.msra.mxu0 0.0
        %527 = vmatprep.subr.mxu0 0.0
        %528 = vmatpush2.msra.mxu0 0.0
        %529 = vmatprep.subr.mxu0 0.0
        %530 = vmatpush2.msra.mxu0 0.0
        %531 = vmatprep.subr.mxu0 0.0
        %532 = vmatpush2.msra.mxu0 0.0
        %533 = vmatprep.subr.mxu0 0.0
        %534 = vmatpush2.msra.mxu0 0.0
        %535 = vmatprep.subr.mxu0 0.0
        %536 = vmatpush2.msra.mxu0 0.0
        %537 = vmatprep.subr.mxu0 0.0
        %538 = vmatpush2.msra.mxu0 0.0
        %539 = vmatprep.subr.mxu0 0.0
        %540 = vmatpush2.msra.mxu0 0.0
        %541 = vmatprep.subr.mxu0 0.0
        %542 = vmatpush2.msra.mxu0 0.0
        %543 = vmatprep.subr.mxu0 0.0
        %544 = vmatpush2.msra.mxu0 0.0
        %545 = vmatprep.subr.mxu0 0.0
        %546 = vmatpush2.msra.mxu0 0.0
        %547 = vmatprep.subr.mxu0 0.0
        %548 = vmatpush2.msra.mxu0 0.0
        %549 = vmatprep.subr.mxu0 0.0
        %550 = vmatpush2.msra.mxu0 0.0
        %551 = vmatprep.subr.mxu0 0.0
        %552 = vmatpush2.msra.mxu0 0.0
        %553 = vmatprep.subr.mxu0 0.0
        %554 = vmatpush2.msra.mxu0 0.0
        %555 = vmatprep.subr.mxu0 0.0
        %556 = vmatpush2.msra.mxu0 0.0
        %557 = vmatprep.mubr.f32.mxu0 0.0
        %v558 = vand.u32 %v229, 4294901760
        %v559 = vsub.f32 %v229, %v558
        %v560 = vand.u32 %v559, 4294901760
        %561 = vmatmul.mubr.f32.gmra.mxu0 %v560
        %v562 = vpop.f32.mrf.mxu0
        %v563 = vadd.f32 %v481, %v562
        %v564 = vpop.f32.mrf.mxu0
        %565 = vmatprep.mubr.f32.mxu0 0.0
        %v566 = vand.u32 %v232, 4294901760
        %v567 = vsub.f32 %v232, %v566
        %v568 = vand.u32 %v567, 4294901760
        %569 = vmatmul.mubr.f32.gmra.mxu0 %v568
        %v570 = vpop.f32.mrf.mxu0
        %v571 = vadd.f32 %v488, %v570
        %v572 = vpop.f32.mrf.mxu0
        %573 = vdwg.mxu0
        %574 = vmatprep.subr.mxu0 0.0
        %575 = vmatpush1.msra.mxu0 0.0
        %576 = vmatprep.subr.mxu0 0.0
        %577 = vmatpush1.msra.mxu0 0.0
        %578 = vmatprep.subr.mxu0 0.0
        %579 = vmatpush1.msra.mxu0 0.0
        %580 = vmatprep.subr.mxu0 0.0
        %581 = vmatpush1.msra.mxu0 0.0
        %582 = vmatprep.subr.mxu0 0.0
        %583 = vmatpush1.msra.mxu0 0.0
        %584 = vmatprep.subr.mxu0 0.0
        %585 = vmatpush1.msra.mxu0 0.0
        %586 = vmatprep.subr.mxu0 0.0
        %587 = vmatpush1.msra.mxu0 0.0
        %588 = vmatprep.subr.mxu0 0.0
        %589 = vmatpush1.msra.mxu0 0.0
        %590 = vmatprep.subr.mxu0 0.0
        %591 = vmatpush1.msra.mxu0 0.0
        %592 = vmatprep.subr.mxu0 0.0
        %593 = vmatpush1.msra.mxu0 0.0
        %594 = vmatprep.subr.mxu0 0.0
        %595 = vmatpush1.msra.mxu0 0.0
        %596 = vmatprep.subr.mxu0 0.0
        %597 = vmatpush1.msra.mxu0 0.0
        %598 = vmatprep.subr.mxu0 0.0
        %599 = vmatpush1.msra.mxu0 0.0
        %600 = vmatprep.subr.mxu0 0.0
        %601 = vmatpush1.msra.mxu0 0.0
        %602 = vmatprep.subr.mxu0 0.0
        %v603 = vand.u32 %v226, 4294901760
        %v604 = vsub.f32 %v226, %v603
        %v605 = vand.u32 %v604, 4294901760
        %606 = vmatpush1.msra.mxu0 %v605
        %607 = vmatprep.subr.mxu0 0.0
        %v608 = vand.u32 %v225, 4294901760
        %v609 = vsub.f32 %v225, %v608
        %v610 = vand.u32 %v609, 4294901760
        %611 = vmatpush1.msra.mxu0 %v610
        %612 = vmatprep.subr.mxu0 0.0
        %613 = vmatpush2.msra.mxu0 0.0
        %614 = vmatprep.subr.mxu0 0.0
        %615 = vmatpush2.msra.mxu0 0.0
        %616 = vmatprep.subr.mxu0 0.0
        %617 = vmatpush2.msra.mxu0 0.0
        %618 = vmatprep.subr.mxu0 0.0
        %619 = vmatpush2.msra.mxu0 0.0
        %620 = vmatprep.subr.mxu0 0.0
        %621 = vmatpush2.msra.mxu0 0.0
        %622 = vmatprep.subr.mxu0 0.0
        %623 = vmatpush2.msra.mxu0 0.0
        %624 = vmatprep.subr.mxu0 0.0
        %625 = vmatpush2.msra.mxu0 0.0
        %626 = vmatprep.subr.mxu0 0.0
        %627 = vmatpush2.msra.mxu0 0.0
        %628 = vmatprep.subr.mxu0 0.0
        %629 = vmatpush2.msra.mxu0 0.0
        %630 = vmatprep.subr.mxu0 0.0
        %631 = vmatpush2.msra.mxu0 0.0
        %632 = vmatprep.subr.mxu0 0.0
        %633 = vmatpush2.msra.mxu0 0.0
        %634 = vmatprep.subr.mxu0 0.0
        %635 = vmatpush2.msra.mxu0 0.0
        %636 = vmatprep.subr.mxu0 0.0
        %637 = vmatpush2.msra.mxu0 0.0
        %638 = vmatprep.subr.mxu0 0.0
        %639 = vmatpush2.msra.mxu0 0.0
        %640 = vmatprep.subr.mxu0 0.0
        %641 = vmatpush2.msra.mxu0 0.0
        %642 = vmatprep.subr.mxu0 0.0
        %643 = vmatpush2.msra.mxu0 0.0
        %644 = vmatprep.mubr.f32.mxu0 0.0
        %v645 = vand.u32 %v229, 4294901760
        %646 = vmatmul.mubr.f32.gmra.mxu0 %v645
        %v647 = vpop.f32.mrf.mxu0
        %v648 = vadd.f32 %v563, %v647
        %v649 = vpop.f32.mrf.mxu0
        %650 = vmatprep.mubr.f32.mxu0 0.0
        %v651 = vand.u32 %v232, 4294901760
        %652 = vmatmul.mubr.f32.gmra.mxu0 %v651
        %v653 = vpop.f32.mrf.mxu0
        %v654 = vadd.f32 %v571, %v653
        %v655 = vpop.f32.mrf.mxu0
        %656 = vdwg.mxu0
        %657 = vmatprep.subr.mxu0 0.0
        %658 = vmatpush1.msra.mxu0 0.0
        %659 = vmatprep.subr.mxu0 0.0
        %660 = vmatpush1.msra.mxu0 0.0
        %661 = vmatprep.subr.mxu0 0.0
        %662 = vmatpush1.msra.mxu0 0.0
        %663 = vmatprep.subr.mxu0 0.0
        %664 = vmatpush1.msra.mxu0 0.0
        %665 = vmatprep.subr.mxu0 0.0
        %666 = vmatpush1.msra.mxu0 0.0
        %667 = vmatprep.subr.mxu0 0.0
        %668 = vmatpush1.msra.mxu0 0.0
        %669 = vmatprep.subr.mxu0 0.0
        %670 = vmatpush1.msra.mxu0 0.0
        %671 = vmatprep.subr.mxu0 0.0
        %672 = vmatpush1.msra.mxu0 0.0
        %673 = vmatprep.subr.mxu0 0.0
        %674 = vmatpush1.msra.mxu0 0.0
        %675 = vmatprep.subr.mxu0 0.0
        %676 = vmatpush1.msra.mxu0 0.0
        %677 = vmatprep.subr.mxu0 0.0
        %678 = vmatpush1.msra.mxu0 0.0
        %679 = vmatprep.subr.mxu0 0.0
        %680 = vmatpush1.msra.mxu0 0.0
        %681 = vmatprep.subr.mxu0 0.0
        %682 = vmatpush1.msra.mxu0 0.0
        %683 = vmatprep.subr.mxu0 0.0
        %684 = vmatpush1.msra.mxu0 0.0
        %685 = vmatprep.subr.mxu0 0.0
        %v686 = vand.u32 %v226, 4294901760
        %687 = vmatpush1.msra.mxu0 %v686
        %688 = vmatprep.subr.mxu0 0.0
        %v689 = vand.u32 %v225, 4294901760
        %690 = vmatpush1.msra.mxu0 %v689
        %691 = vmatprep.subr.mxu0 0.0
        %692 = vmatpush2.msra.mxu0 0.0
        %693 = vmatprep.subr.mxu0 0.0
        %694 = vmatpush2.msra.mxu0 0.0
        %695 = vmatprep.subr.mxu0 0.0
        %696 = vmatpush2.msra.mxu0 0.0
        %697 = vmatprep.subr.mxu0 0.0
        %698 = vmatpush2.msra.mxu0 0.0
        %699 = vmatprep.subr.mxu0 0.0
        %700 = vmatpush2.msra.mxu0 0.0
        %701 = vmatprep.subr.mxu0 0.0
        %702 = vmatpush2.msra.mxu0 0.0
        %703 = vmatprep.subr.mxu0 0.0
        %704 = vmatpush2.msra.mxu0 0.0
        %705 = vmatprep.subr.mxu0 0.0
        %706 = vmatpush2.msra.mxu0 0.0
        %707 = vmatprep.subr.mxu0 0.0
        %708 = vmatpush2.msra.mxu0 0.0
        %709 = vmatprep.subr.mxu0 0.0
        %710 = vmatpush2.msra.mxu0 0.0
        %711 = vmatprep.subr.mxu0 0.0
        %712 = vmatpush2.msra.mxu0 0.0
        %713 = vmatprep.subr.mxu0 0.0
        %714 = vmatpush2.msra.mxu0 0.0
        %715 = vmatprep.subr.mxu0 0.0
        %716 = vmatpush2.msra.mxu0 0.0
        %717 = vmatprep.subr.mxu0 0.0
        %718 = vmatpush2.msra.mxu0 0.0
        %719 = vmatprep.subr.mxu0 0.0
        %720 = vmatpush2.msra.mxu0 0.0
        %721 = vmatprep.subr.mxu0 0.0
        %722 = vmatpush2.msra.mxu0 0.0
        %723 = vmatprep.mubr.f32.mxu0 0.0
        %v724 = vand.u32 %v229, 4294901760
        %725 = vmatmul.mubr.f32.gmra.mxu0 %v724
        %v726 = vpop.f32.mrf.mxu0
        %v727 = vadd.f32 %v648, %v726
        %v728 = vpop.f32.mrf.mxu0
        %729 = vmatprep.mubr.f32.mxu0 0.0
        %v730 = vand.u32 %v232, 4294901760
        %731 = vmatmul.mubr.f32.gmra.mxu0 %v730
        %v732 = vpop.f32.mrf.mxu0
        %v733 = vadd.f32 %v654, %v732
        %v734 = vpop.f32.mrf.mxu0
        %735 = vdwg.mxu0
        %v737 = vsel %vm227, %v727, 0
        %v740 = vsel %vm227, %v733, 0
        %742 = vmatprep.subr.mxu0 0.0
        %743 = vmatpush1.msra.mxu0 0.0
        %744 = vmatprep.subr.mxu0 0.0
        %745 = vmatpush1.msra.mxu0 0.0
        %746 = vmatprep.subr.mxu0 0.0
        %747 = vmatpush1.msra.mxu0 0.0
        %748 = vmatprep.subr.mxu0 0.0
        %749 = vmatpush1.msra.mxu0 0.0
        %750 = vmatprep.subr.mxu0 0.0
        %751 = vmatpush1.msra.mxu0 0.0
        %752 = vmatprep.subr.mxu0 0.0
        %753 = vmatpush1.msra.mxu0 0.0
        %754 = vmatprep.subr.mxu0 0.0
        %755 = vmatpush1.msra.mxu0 0.0
        %756 = vmatprep.subr.mxu0 0.0
        %757 = vmatpush1.msra.mxu0 0.0
        %758 = vmatprep.subr.mxu0 0.0
        %759 = vmatpush1.msra.mxu0 0.0
        %760 = vmatprep.subr.mxu0 0.0
        %761 = vmatpush1.msra.mxu0 0.0
        %762 = vmatprep.subr.mxu0 0.0
        %763 = vmatpush1.msra.mxu0 0.0
        %764 = vmatprep.subr.mxu0 0.0
        %765 = vmatpush1.msra.mxu0 0.0
        %766 = vmatprep.subr.mxu0 0.0
        %767 = vmatpush1.msra.mxu0 0.0
        %768 = vmatprep.subr.mxu0 0.0
        %769 = vmatpush1.msra.mxu0 0.0
        %770 = vmatprep.subr.mxu0 0.0
        %v771 = vand.u32 %v224, 4294901760
        %772 = vmatpush1.msra.mxu0 %v771
        %773 = vmatprep.subr.mxu0 0.0
        %v774 = vand.u32 %v223, 4294901760
        %775 = vmatpush1.msra.mxu0 %v774
        %776 = vmatprep.subr.mxu0 0.0
        %777 = vmatpush2.msra.mxu0 0.0
        %778 = vmatprep.subr.mxu0 0.0
        %779 = vmatpush2.msra.mxu0 0.0
        %780 = vmatprep.subr.mxu0 0.0
        %781 = vmatpush2.msra.mxu0 0.0
        %782 = vmatprep.subr.mxu0 0.0
        %783 = vmatpush2.msra.mxu0 0.0
        %784 = vmatprep.subr.mxu0 0.0
        %785 = vmatpush2.msra.mxu0 0.0
        %786 = vmatprep.subr.mxu0 0.0
        %787 = vmatpush2.msra.mxu0 0.0
        %788 = vmatprep.subr.mxu0 0.0
        %789 = vmatpush2.msra.mxu0 0.0
        %790 = vmatprep.subr.mxu0 0.0
        %791 = vmatpush2.msra.mxu0 0.0
        %792 = vmatprep.subr.mxu0 0.0
        %793 = vmatpush2.msra.mxu0 0.0
        %794 = vmatprep.subr.mxu0 0.0
        %795 = vmatpush2.msra.mxu0 0.0
        %796 = vmatprep.subr.mxu0 0.0
        %797 = vmatpush2.msra.mxu0 0.0
        %798 = vmatprep.subr.mxu0 0.0
        %799 = vmatpush2.msra.mxu0 0.0
        %800 = vmatprep.subr.mxu0 0.0
        %801 = vmatpush2.msra.mxu0 0.0
        %802 = vmatprep.subr.mxu0 0.0
        %803 = vmatpush2.msra.mxu0 0.0
        %804 = vmatprep.subr.mxu0 0.0
        %805 = vmatpush2.msra.mxu0 0.0
        %806 = vmatprep.subr.mxu0 0.0
        %807 = vmatpush2.msra.mxu0 0.0
        %808 = vmatprep.mubr.f32.mxu0 0.0
        %v809 = vand.u32 %v737, 4294901760
        %v810 = vsub.f32 %v737, %v809
        %v811 = vand.u32 %v810, 4294901760
        %v812 = vsub.f32 %v810, %v811
        %v813 = vand.u32 %v812, 4294901760
        %814 = vmatmul.mubr.f32.gmra.mxu0 %v813
        %v815 = vpop.f32.mrf.mxu0
        %v816 = vadd.f32 0.0, %v815
        %v817 = vpop.f32.mrf.mxu0
        %818 = vmatprep.mubr.f32.mxu0 0.0
        %v819 = vand.u32 %v740, 4294901760
        %v820 = vsub.f32 %v740, %v819
        %v821 = vand.u32 %v820, 4294901760
        %v822 = vsub.f32 %v820, %v821
        %v823 = vand.u32 %v822, 4294901760
        %824 = vmatmul.mubr.f32.gmra.mxu0 %v823
        %v825 = vpop.f32.mrf.mxu0
        %v826 = vadd.f32 0.0, %v825
        %v827 = vpop.f32.mrf.mxu0
        %828 = vdwg.mxu0
        %829 = vmatprep.subr.mxu0 0.0
        %830 = vmatpush1.msra.mxu0 0.0
        %831 = vmatprep.subr.mxu0 0.0
        %832 = vmatpush1.msra.mxu0 0.0
        %833 = vmatprep.subr.mxu0 0.0
        %834 = vmatpush1.msra.mxu0 0.0
        %835 = vmatprep.subr.mxu0 0.0
        %836 = vmatpush1.msra.mxu0 0.0
        %837 = vmatprep.subr.mxu0 0.0
        %838 = vmatpush1.msra.mxu0 0.0
        %839 = vmatprep.subr.mxu0 0.0
        %840 = vmatpush1.msra.mxu0 0.0
        %841 = vmatprep.subr.mxu0 0.0
        %842 = vmatpush1.msra.mxu0 0.0
        %843 = vmatprep.subr.mxu0 0.0
        %844 = vmatpush1.msra.mxu0 0.0
        %845 = vmatprep.subr.mxu0 0.0
        %846 = vmatpush1.msra.mxu0 0.0
        %847 = vmatprep.subr.mxu0 0.0
        %848 = vmatpush1.msra.mxu0 0.0
        %849 = vmatprep.subr.mxu0 0.0
        %850 = vmatpush1.msra.mxu0 0.0
        %851 = vmatprep.subr.mxu0 0.0
        %852 = vmatpush1.msra.mxu0 0.0
        %853 = vmatprep.subr.mxu0 0.0
        %854 = vmatpush1.msra.mxu0 0.0
        %855 = vmatprep.subr.mxu0 0.0
        %856 = vmatpush1.msra.mxu0 0.0
        %857 = vmatprep.subr.mxu0 0.0
        %v858 = vand.u32 %v224, 4294901760
        %v859 = vsub.f32 %v224, %v858
        %v860 = vand.u32 %v859, 4294901760
        %v861 = vsub.f32 %v859, %v860
        %v862 = vand.u32 %v861, 4294901760
        %863 = vmatpush1.msra.mxu0 %v862
        %864 = vmatprep.subr.mxu0 0.0
        %v865 = vand.u32 %v223, 4294901760
        %v866 = vsub.f32 %v223, %v865
        %v867 = vand.u32 %v866, 4294901760
        %v868 = vsub.f32 %v866, %v867
        %v869 = vand.u32 %v868, 4294901760
        %870 = vmatpush1.msra.mxu0 %v869
        %871 = vmatprep.subr.mxu0 0.0
        %872 = vmatpush2.msra.mxu0 0.0
        %873 = vmatprep.subr.mxu0 0.0
        %874 = vmatpush2.msra.mxu0 0.0
        %875 = vmatprep.subr.mxu0 0.0
        %876 = vmatpush2.msra.mxu0 0.0
        %877 = vmatprep.subr.mxu0 0.0
        %878 = vmatpush2.msra.mxu0 0.0
        %879 = vmatprep.subr.mxu0 0.0
        %880 = vmatpush2.msra.mxu0 0.0
        %881 = vmatprep.subr.mxu0 0.0
        %882 = vmatpush2.msra.mxu0 0.0
        %883 = vmatprep.subr.mxu0 0.0
        %884 = vmatpush2.msra.mxu0 0.0
        %885 = vmatprep.subr.mxu0 0.0
        %886 = vmatpush2.msra.mxu0 0.0
        %887 = vmatprep.subr.mxu0 0.0
        %888 = vmatpush2.msra.mxu0 0.0
        %889 = vmatprep.subr.mxu0 0.0
        %890 = vmatpush2.msra.mxu0 0.0
        %891 = vmatprep.subr.mxu0 0.0
        %892 = vmatpush2.msra.mxu0 0.0
        %893 = vmatprep.subr.mxu0 0.0
        %894 = vmatpush2.msra.mxu0 0.0
        %895 = vmatprep.subr.mxu0 0.0
        %896 = vmatpush2.msra.mxu0 0.0
        %897 = vmatprep.subr.mxu0 0.0
        %898 = vmatpush2.msra.mxu0 0.0
        %899 = vmatprep.subr.mxu0 0.0
        %900 = vmatpush2.msra.mxu0 0.0
        %901 = vmatprep.subr.mxu0 0.0
        %902 = vmatpush2.msra.mxu0 0.0
        %903 = vmatprep.mubr.f32.mxu0 0.0
        %v904 = vand.u32 %v737, 4294901760
        %905 = vmatmul.mubr.f32.gmra.mxu0 %v904
        %v906 = vpop.f32.mrf.mxu0
        %v907 = vadd.f32 %v816, %v906
        %v908 = vpop.f32.mrf.mxu0
        %909 = vmatprep.mubr.f32.mxu0 0.0
        %v910 = vand.u32 %v740, 4294901760
        %911 = vmatmul.mubr.f32.gmra.mxu0 %v910
        %v912 = vpop.f32.mrf.mxu0
        %v913 = vadd.f32 %v826, %v912
        %v914 = vpop.f32.mrf.mxu0
        %915 = vdwg.mxu0
        %916 = vmatprep.subr.mxu0 0.0
        %917 = vmatpush1.msra.mxu0 0.0
        %918 = vmatprep.subr.mxu0 0.0
        %919 = vmatpush1.msra.mxu0 0.0
        %920 = vmatprep.subr.mxu0 0.0
        %921 = vmatpush1.msra.mxu0 0.0
        %922 = vmatprep.subr.mxu0 0.0
        %923 = vmatpush1.msra.mxu0 0.0
        %924 = vmatprep.subr.mxu0 0.0
        %925 = vmatpush1.msra.mxu0 0.0
        %926 = vmatprep.subr.mxu0 0.0
        %927 = vmatpush1.msra.mxu0 0.0
        %928 = vmatprep.subr.mxu0 0.0
        %929 = vmatpush1.msra.mxu0 0.0
        %930 = vmatprep.subr.mxu0 0.0
        %931 = vmatpush1.msra.mxu0 0.0
        %932 = vmatprep.subr.mxu0 0.0
        %933 = vmatpush1.msra.mxu0 0.0
        %934 = vmatprep.subr.mxu0 0.0
        %935 = vmatpush1.msra.mxu0 0.0
        %936 = vmatprep.subr.mxu0 0.0
        %937 = vmatpush1.msra.mxu0 0.0
        %938 = vmatprep.subr.mxu0 0.0
        %939 = vmatpush1.msra.mxu0 0.0
        %940 = vmatprep.subr.mxu0 0.0
        %941 = vmatpush1.msra.mxu0 0.0
        %942 = vmatprep.subr.mxu0 0.0
        %943 = vmatpush1.msra.mxu0 0.0
        %944 = vmatprep.subr.mxu0 0.0
        %v945 = vand.u32 %v224, 4294901760
        %v946 = vsub.f32 %v224, %v945
        %947 = vmatpush1.msra.mxu0 %v946
        %948 = vmatprep.subr.mxu0 0.0
        %v949 = vand.u32 %v223, 4294901760
        %v950 = vsub.f32 %v223, %v949
        %951 = vmatpush1.msra.mxu0 %v950
        %952 = vmatprep.subr.mxu0 0.0
        %953 = vmatpush2.msra.mxu0 0.0
        %954 = vmatprep.subr.mxu0 0.0
        %955 = vmatpush2.msra.mxu0 0.0
        %956 = vmatprep.subr.mxu0 0.0
        %957 = vmatpush2.msra.mxu0 0.0
        %958 = vmatprep.subr.mxu0 0.0
        %959 = vmatpush2.msra.mxu0 0.0
        %960 = vmatprep.subr.mxu0 0.0
        %961 = vmatpush2.msra.mxu0 0.0
        %962 = vmatprep.subr.mxu0 0.0
        %963 = vmatpush2.msra.mxu0 0.0
        %964 = vmatprep.subr.mxu0 0.0
        %965 = vmatpush2.msra.mxu0 0.0
        %966 = vmatprep.subr.mxu0 0.0
        %967 = vmatpush2.msra.mxu0 0.0
        %968 = vmatprep.subr.mxu0 0.0
        %969 = vmatpush2.msra.mxu0 0.0
        %970 = vmatprep.subr.mxu0 0.0
        %971 = vmatpush2.msra.mxu0 0.0
        %972 = vmatprep.subr.mxu0 0.0
        %973 = vmatpush2.msra.mxu0 0.0
        %974 = vmatprep.subr.mxu0 0.0
        %975 = vmatpush2.msra.mxu0 0.0
        %976 = vmatprep.subr.mxu0 0.0
        %977 = vmatpush2.msra.mxu0 0.0
        %978 = vmatprep.subr.mxu0 0.0
        %979 = vmatpush2.msra.mxu0 0.0
        %980 = vmatprep.subr.mxu0 0.0
        %981 = vmatpush2.msra.mxu0 0.0
        %982 = vmatprep.subr.mxu0 0.0
        %983 = vmatpush2.msra.mxu0 0.0
        %984 = vmatprep.mubr.f32.mxu0 0.0
        %v985 = vand.u32 %v737, 4294901760
        %v986 = vsub.f32 %v737, %v985
        %987 = vmatmul.mubr.f32.gmra.mxu0 %v986
        %v988 = vpop.f32.mrf.mxu0
        %v989 = vadd.f32 %v907, %v988
        %v990 = vpop.f32.mrf.mxu0
        %991 = vmatprep.mubr.f32.mxu0 0.0
        %v992 = vand.u32 %v740, 4294901760
        %v993 = vsub.f32 %v740, %v992
        %994 = vmatmul.mubr.f32.gmra.mxu0 %v993
        %v995 = vpop.f32.mrf.mxu0
        %v996 = vadd.f32 %v913, %v995
        %v997 = vpop.f32.mrf.mxu0
        %998 = vdwg.mxu0
        %999 = vmatprep.subr.mxu0 0.0
        %1000 = vmatpush1.msra.mxu0 0.0
        %1001 = vmatprep.subr.mxu0 0.0
        %1002 = vmatpush1.msra.mxu0 0.0
        %1003 = vmatprep.subr.mxu0 0.0
        %1004 = vmatpush1.msra.mxu0 0.0
        %1005 = vmatprep.subr.mxu0 0.0
        %1006 = vmatpush1.msra.mxu0 0.0
        %1007 = vmatprep.subr.mxu0 0.0
        %1008 = vmatpush1.msra.mxu0 0.0
        %1009 = vmatprep.subr.mxu0 0.0
        %1010 = vmatpush1.msra.mxu0 0.0
        %1011 = vmatprep.subr.mxu0 0.0
        %1012 = vmatpush1.msra.mxu0 0.0
        %1013 = vmatprep.subr.mxu0 0.0
        %1014 = vmatpush1.msra.mxu0 0.0
        %1015 = vmatprep.subr.mxu0 0.0
        %1016 = vmatpush1.msra.mxu0 0.0
        %1017 = vmatprep.subr.mxu0 0.0
        %1018 = vmatpush1.msra.mxu0 0.0
        %1019 = vmatprep.subr.mxu0 0.0
        %1020 = vmatpush1.msra.mxu0 0.0
        %1021 = vmatprep.subr.mxu0 0.0
        %1022 = vmatpush1.msra.mxu0 0.0
        %1023 = vmatprep.subr.mxu0 0.0
        %1024 = vmatpush1.msra.mxu0 0.0
        %1025 = vmatprep.subr.mxu0 0.0
        %1026 = vmatpush1.msra.mxu0 0.0
        %1027 = vmatprep.subr.mxu0 0.0
        %v1028 = vand.u32 %v224, 4294901760
        %1029 = vmatpush1.msra.mxu0 %v1028
        %1030 = vmatprep.subr.mxu0 0.0
        %v1031 = vand.u32 %v223, 4294901760
        %1032 = vmatpush1.msra.mxu0 %v1031
        %1033 = vmatprep.subr.mxu0 0.0
        %1034 = vmatpush2.msra.mxu0 0.0
        %1035 = vmatprep.subr.mxu0 0.0
        %1036 = vmatpush2.msra.mxu0 0.0
        %1037 = vmatprep.subr.mxu0 0.0
        %1038 = vmatpush2.msra.mxu0 0.0
        %1039 = vmatprep.subr.mxu0 0.0
        %1040 = vmatpush2.msra.mxu0 0.0
        %1041 = vmatprep.subr.mxu0 0.0
        %1042 = vmatpush2.msra.mxu0 0.0
        %1043 = vmatprep.subr.mxu0 0.0
        %1044 = vmatpush2.msra.mxu0 0.0
        %1045 = vmatprep.subr.mxu0 0.0
        %1046 = vmatpush2.msra.mxu0 0.0
        %1047 = vmatprep.subr.mxu0 0.0
        %1048 = vmatpush2.msra.mxu0 0.0
        %1049 = vmatprep.subr.mxu0 0.0
        %1050 = vmatpush2.msra.mxu0 0.0
        %1051 = vmatprep.subr.mxu0 0.0
        %1052 = vmatpush2.msra.mxu0 0.0
        %1053 = vmatprep.subr.mxu0 0.0
        %1054 = vmatpush2.msra.mxu0 0.0
        %1055 = vmatprep.subr.mxu0 0.0
        %1056 = vmatpush2.msra.mxu0 0.0
        %1057 = vmatprep.subr.mxu0 0.0
        %1058 = vmatpush2.msra.mxu0 0.0
        %1059 = vmatprep.subr.mxu0 0.0
        %1060 = vmatpush2.msra.mxu0 0.0
        %1061 = vmatprep.subr.mxu0 0.0
        %1062 = vmatpush2.msra.mxu0 0.0
        %1063 = vmatprep.subr.mxu0 0.0
        %1064 = vmatpush2.msra.mxu0 0.0
        %1065 = vmatprep.mubr.f32.mxu0 0.0
        %v1066 = vand.u32 %v737, 4294901760
        %v1067 = vsub.f32 %v737, %v1066
        %v1068 = vand.u32 %v1067, 4294901760
        %1069 = vmatmul.mubr.f32.gmra.mxu0 %v1068
        %v1070 = vpop.f32.mrf.mxu0
        %v1071 = vadd.f32 %v989, %v1070
        %v1072 = vpop.f32.mrf.mxu0
        %1073 = vmatprep.mubr.f32.mxu0 0.0
        %v1074 = vand.u32 %v740, 4294901760
        %v1075 = vsub.f32 %v740, %v1074
        %v1076 = vand.u32 %v1075, 4294901760
        %1077 = vmatmul.mubr.f32.gmra.mxu0 %v1076
        %v1078 = vpop.f32.mrf.mxu0
        %v1079 = vadd.f32 %v996, %v1078
        %v1080 = vpop.f32.mrf.mxu0
        %1081 = vdwg.mxu0
        %1082 = vmatprep.subr.mxu0 0.0
        %1083 = vmatpush1.msra.mxu0 0.0
        %1084 = vmatprep.subr.mxu0 0.0
        %1085 = vmatpush1.msra.mxu0 0.0
        %1086 = vmatprep.subr.mxu0 0.0
        %1087 = vmatpush1.msra.mxu0 0.0
        %1088 = vmatprep.subr.mxu0 0.0
        %1089 = vmatpush1.msra.mxu0 0.0
        %1090 = vmatprep.subr.mxu0 0.0
        %1091 = vmatpush1.msra.mxu0 0.0
        %1092 = vmatprep.subr.mxu0 0.0
        %1093 = vmatpush1.msra.mxu0 0.0
        %1094 = vmatprep.subr.mxu0 0.0
        %1095 = vmatpush1.msra.mxu0 0.0
        %1096 = vmatprep.subr.mxu0 0.0
        %1097 = vmatpush1.msra.mxu0 0.0
        %1098 = vmatprep.subr.mxu0 0.0
        %1099 = vmatpush1.msra.mxu0 0.0
        %1100 = vmatprep.subr.mxu0 0.0
        %1101 = vmatpush1.msra.mxu0 0.0
        %1102 = vmatprep.subr.mxu0 0.0
        %1103 = vmatpush1.msra.mxu0 0.0
        %1104 = vmatprep.subr.mxu0 0.0
        %1105 = vmatpush1.msra.mxu0 0.0
        %1106 = vmatprep.subr.mxu0 0.0
        %1107 = vmatpush1.msra.mxu0 0.0
        %1108 = vmatprep.subr.mxu0 0.0
        %1109 = vmatpush1.msra.mxu0 0.0
        %1110 = vmatprep.subr.mxu0 0.0
        %v1111 = vand.u32 %v224, 4294901760
        %v1112 = vsub.f32 %v224, %v1111
        %v1113 = vand.u32 %v1112, 4294901760
        %1114 = vmatpush1.msra.mxu0 %v1113
        %1115 = vmatprep.subr.mxu0 0.0
        %v1116 = vand.u32 %v223, 4294901760
        %v1117 = vsub.f32 %v223, %v1116
        %v1118 = vand.u32 %v1117, 4294901760
        %1119 = vmatpush1.msra.mxu0 %v1118
        %1120 = vmatprep.subr.mxu0 0.0
        %1121 = vmatpush2.msra.mxu0 0.0
        %1122 = vmatprep.subr.mxu0 0.0
        %1123 = vmatpush2.msra.mxu0 0.0
        %1124 = vmatprep.subr.mxu0 0.0
        %1125 = vmatpush2.msra.mxu0 0.0
        %1126 = vmatprep.subr.mxu0 0.0
        %1127 = vmatpush2.msra.mxu0 0.0
        %1128 = vmatprep.subr.mxu0 0.0
        %1129 = vmatpush2.msra.mxu0 0.0
        %1130 = vmatprep.subr.mxu0 0.0
        %1131 = vmatpush2.msra.mxu0 0.0
        %1132 = vmatprep.subr.mxu0 0.0
        %1133 = vmatpush2.msra.mxu0 0.0
        %1134 = vmatprep.subr.mxu0 0.0
        %1135 = vmatpush2.msra.mxu0 0.0
        %1136 = vmatprep.subr.mxu0 0.0
        %1137 = vmatpush2.msra.mxu0 0.0
        %1138 = vmatprep.subr.mxu0 0.0
        %1139 = vmatpush2.msra.mxu0 0.0
        %1140 = vmatprep.subr.mxu0 0.0
        %1141 = vmatpush2.msra.mxu0 0.0
        %1142 = vmatprep.subr.mxu0 0.0
        %1143 = vmatpush2.msra.mxu0 0.0
        %1144 = vmatprep.subr.mxu0 0.0
        %1145 = vmatpush2.msra.mxu0 0.0
        %1146 = vmatprep.subr.mxu0 0.0
        %1147 = vmatpush2.msra.mxu0 0.0
        %1148 = vmatprep.subr.mxu0 0.0
        %1149 = vmatpush2.msra.mxu0 0.0
        %1150 = vmatprep.subr.mxu0 0.0
        %1151 = vmatpush2.msra.mxu0 0.0
        %1152 = vmatprep.mubr.f32.mxu0 0.0
        %v1153 = vand.u32 %v737, 4294901760
        %1154 = vmatmul.mubr.f32.gmra.mxu0 %v1153
        %v1155 = vpop.f32.mrf.mxu0
        %v1156 = vadd.f32 %v1071, %v1155
        %v1157 = vpop.f32.mrf.mxu0
        %1158 = vmatprep.mubr.f32.mxu0 0.0
        %v1159 = vand.u32 %v740, 4294901760
        %1160 = vmatmul.mubr.f32.gmra.mxu0 %v1159
        %v1161 = vpop.f32.mrf.mxu0
        %v1162 = vadd.f32 %v1079, %v1161
        %v1163 = vpop.f32.mrf.mxu0
        %1164 = vdwg.mxu0
        %1165 = vmatprep.subr.mxu0 0.0
        %1166 = vmatpush1.msra.mxu0 0.0
        %1167 = vmatprep.subr.mxu0 0.0
        %1168 = vmatpush1.msra.mxu0 0.0
        %1169 = vmatprep.subr.mxu0 0.0
        %1170 = vmatpush1.msra.mxu0 0.0
        %1171 = vmatprep.subr.mxu0 0.0
        %1172 = vmatpush1.msra.mxu0 0.0
        %1173 = vmatprep.subr.mxu0 0.0
        %1174 = vmatpush1.msra.mxu0 0.0
        %1175 = vmatprep.subr.mxu0 0.0
        %1176 = vmatpush1.msra.mxu0 0.0
        %1177 = vmatprep.subr.mxu0 0.0
        %1178 = vmatpush1.msra.mxu0 0.0
        %1179 = vmatprep.subr.mxu0 0.0
        %1180 = vmatpush1.msra.mxu0 0.0
        %1181 = vmatprep.subr.mxu0 0.0
        %1182 = vmatpush1.msra.mxu0 0.0
        %1183 = vmatprep.subr.mxu0 0.0
        %1184 = vmatpush1.msra.mxu0 0.0
        %1185 = vmatprep.subr.mxu0 0.0
        %1186 = vmatpush1.msra.mxu0 0.0
        %1187 = vmatprep.subr.mxu0 0.0
        %1188 = vmatpush1.msra.mxu0 0.0
        %1189 = vmatprep.subr.mxu0 0.0
        %1190 = vmatpush1.msra.mxu0 0.0
        %1191 = vmatprep.subr.mxu0 0.0
        %1192 = vmatpush1.msra.mxu0 0.0
        %1193 = vmatprep.subr.mxu0 0.0
        %v1194 = vand.u32 %v224, 4294901760
        %1195 = vmatpush1.msra.mxu0 %v1194
        %1196 = vmatprep.subr.mxu0 0.0
        %v1197 = vand.u32 %v223, 4294901760
        %1198 = vmatpush1.msra.mxu0 %v1197
        %1199 = vmatprep.subr.mxu0 0.0
        %1200 = vmatpush2.msra.mxu0 0.0
        %1201 = vmatprep.subr.mxu0 0.0
        %1202 = vmatpush2.msra.mxu0 0.0
        %1203 = vmatprep.subr.mxu0 0.0
        %1204 = vmatpush2.msra.mxu0 0.0
        %1205 = vmatprep.subr.mxu0 0.0
        %1206 = vmatpush2.msra.mxu0 0.0
        %1207 = vmatprep.subr.mxu0 0.0
        %1208 = vmatpush2.msra.mxu0 0.0
        %1209 = vmatprep.subr.mxu0 0.0
        %1210 = vmatpush2.msra.mxu0 0.0
        %1211 = vmatprep.subr.mxu0 0.0
        %1212 = vmatpush2.msra.mxu0 0.0
        %1213 = vmatprep.subr.mxu0 0.0
        %1214 = vmatpush2.msra.mxu0 0.0
        %1215 = vmatprep.subr.mxu0 0.0
        %1216 = vmatpush2.msra.mxu0 0.0
        %1217 = vmatprep.subr.mxu0 0.0
        %1218 = vmatpush2.msra.mxu0 0.0
        %1219 = vmatprep.subr.mxu0 0.0
        %1220 = vmatpush2.msra.mxu0 0.0
        %1221 = vmatprep.subr.mxu0 0.0
        %1222 = vmatpush2.msra.mxu0 0.0
        %1223 = vmatprep.subr.mxu0 0.0
        %1224 = vmatpush2.msra.mxu0 0.0
        %1225 = vmatprep.subr.mxu0 0.0
        %1226 = vmatpush2.msra.mxu0 0.0
        %1227 = vmatprep.subr.mxu0 0.0
        %1228 = vmatpush2.msra.mxu0 0.0
        %1229 = vmatprep.subr.mxu0 0.0
        %1230 = vmatpush2.msra.mxu0 0.0
        %1231 = vmatprep.mubr.f32.mxu0 0.0
        %v1232 = vand.u32 %v737, 4294901760
        %1233 = vmatmul.mubr.f32.gmra.mxu0 %v1232
        %v1234 = vpop.f32.mrf.mxu0
        %v1235 = vadd.f32 %v1156, %v1234
        %v1236 = vpop.f32.mrf.mxu0
        %1237 = vmatprep.mubr.f32.mxu0 0.0
        %v1238 = vand.u32 %v740, 4294901760
        %1239 = vmatmul.mubr.f32.gmra.mxu0 %v1238
        %v1240 = vpop.f32.mrf.mxu0
        %v1241 = vadd.f32 %v1162, %v1240
        %v1242 = vpop.f32.mrf.mxu0
        %1243 = vdwg.mxu0
        %1244 = vst.msk [vmem:[%s218] sm:$0xff] %vm227, %v1235
        %1245 = vst.msk [vmem:[%s218 + $0x8] sm:$0xff] %vm227, %v1241
        %s1246 = scalar_lea.vmem %s188, 16 [#allocation2]
        %v1247 = vld [vmem:[%s1246] sm:$0xff]
        %v1248 = vld [vmem:[%s1246 + $0x8] sm:$0xff]
        %1249 = vmatprep.subr.mxu0 0.0
        %1250 = vmatpush1.msra.mxu0 0.0
        %1251 = vmatprep.subr.mxu0 0.0
        %1252 = vmatpush1.msra.mxu0 0.0
        %1253 = vmatprep.subr.mxu0 0.0
        %1254 = vmatpush1.msra.mxu0 0.0
        %1255 = vmatprep.subr.mxu0 0.0
        %1256 = vmatpush1.msra.mxu0 0.0
        %1257 = vmatprep.subr.mxu0 0.0
        %1258 = vmatpush1.msra.mxu0 0.0
        %1259 = vmatprep.subr.mxu0 0.0
        %1260 = vmatpush1.msra.mxu0 0.0
        %1261 = vmatprep.subr.mxu0 0.0
        %1262 = vmatpush1.msra.mxu0 0.0
        %1263 = vmatprep.subr.mxu0 0.0
        %1264 = vmatpush1.msra.mxu0 0.0
        %1265 = vmatprep.subr.mxu0 0.0
        %1266 = vmatpush1.msra.mxu0 0.0
        %1267 = vmatprep.subr.mxu0 0.0
        %1268 = vmatpush1.msra.mxu0 0.0
        %1269 = vmatprep.subr.mxu0 0.0
        %1270 = vmatpush1.msra.mxu0 0.0
        %1271 = vmatprep.subr.mxu0 0.0
        %1272 = vmatpush1.msra.mxu0 0.0
        %1273 = vmatprep.subr.mxu0 0.0
        %1274 = vmatpush1.msra.mxu0 0.0
        %1275 = vmatprep.subr.mxu0 0.0
        %1276 = vmatpush1.msra.mxu0 0.0
        %1277 = vmatprep.subr.mxu0 0.0
        %v1278 = vand.u32 %v1248, 4294901760
        %1279 = vmatpush1.msra.mxu0 %v1278
        %1280 = vmatprep.subr.mxu0 0.0
        %v1281 = vand.u32 %v1247, 4294901760
        %1282 = vmatpush1.msra.mxu0 %v1281
        %1283 = vmatprep.subr.mxu0 0.0
        %1284 = vmatpush2.msra.mxu0 0.0
        %1285 = vmatprep.subr.mxu0 0.0
        %1286 = vmatpush2.msra.mxu0 0.0
        %1287 = vmatprep.subr.mxu0 0.0
        %1288 = vmatpush2.msra.mxu0 0.0
        %1289 = vmatprep.subr.mxu0 0.0
        %1290 = vmatpush2.msra.mxu0 0.0
        %1291 = vmatprep.subr.mxu0 0.0
        %1292 = vmatpush2.msra.mxu0 0.0
        %1293 = vmatprep.subr.mxu0 0.0
        %1294 = vmatpush2.msra.mxu0 0.0
        %1295 = vmatprep.subr.mxu0 0.0
        %1296 = vmatpush2.msra.mxu0 0.0
        %1297 = vmatprep.subr.mxu0 0.0
        %1298 = vmatpush2.msra.mxu0 0.0
        %1299 = vmatprep.subr.mxu0 0.0
        %1300 = vmatpush2.msra.mxu0 0.0
        %1301 = vmatprep.subr.mxu0 0.0
        %1302 = vmatpush2.msra.mxu0 0.0
        %1303 = vmatprep.subr.mxu0 0.0
        %1304 = vmatpush2.msra.mxu0 0.0
        %1305 = vmatprep.subr.mxu0 0.0
        %1306 = vmatpush2.msra.mxu0 0.0
        %1307 = vmatprep.subr.mxu0 0.0
        %1308 = vmatpush2.msra.mxu0 0.0
        %1309 = vmatprep.subr.mxu0 0.0
        %1310 = vmatpush2.msra.mxu0 0.0
        %1311 = vmatprep.subr.mxu0 0.0
        %1312 = vmatpush2.msra.mxu0 0.0
        %1313 = vmatprep.subr.mxu0 0.0
        %1314 = vmatpush2.msra.mxu0 0.0
        %1315 = vmatprep.mubr.f32.mxu0 0.0
        %v1316 = vand.u32 %v229, 4294901760
        %v1317 = vsub.f32 %v229, %v1316
        %v1318 = vand.u32 %v1317, 4294901760
        %v1319 = vsub.f32 %v1317, %v1318
        %v1320 = vand.u32 %v1319, 4294901760
        %1321 = vmatmul.mubr.f32.gmra.mxu0 %v1320
        %v1322 = vpop.f32.mrf.mxu0
        %v1323 = vadd.f32 0.0, %v1322
        %v1324 = vpop.f32.mrf.mxu0
        %1325 = vmatprep.mubr.f32.mxu0 0.0
        %v1326 = vand.u32 %v232, 4294901760
        %v1327 = vsub.f32 %v232, %v1326
        %v1328 = vand.u32 %v1327, 4294901760
        %v1329 = vsub.f32 %v1327, %v1328
        %v1330 = vand.u32 %v1329, 4294901760
        %1331 = vmatmul.mubr.f32.gmra.mxu0 %v1330
        %v1332 = vpop.f32.mrf.mxu0
        %v1333 = vadd.f32 0.0, %v1332
        %v1334 = vpop.f32.mrf.mxu0
        %1335 = vdwg.mxu0
        %1336 = vmatprep.subr.mxu0 0.0
        %1337 = vmatpush1.msra.mxu0 0.0
        %1338 = vmatprep.subr.mxu0 0.0
        %1339 = vmatpush1.msra.mxu0 0.0
        %1340 = vmatprep.subr.mxu0 0.0
        %1341 = vmatpush1.msra.mxu0 0.0
        %1342 = vmatprep.subr.mxu0 0.0
        %1343 = vmatpush1.msra.mxu0 0.0
        %1344 = vmatprep.subr.mxu0 0.0
        %1345 = vmatpush1.msra.mxu0 0.0
        %1346 = vmatprep.subr.mxu0 0.0
        %1347 = vmatpush1.msra.mxu0 0.0
        %1348 = vmatprep.subr.mxu0 0.0
        %1349 = vmatpush1.msra.mxu0 0.0
        %1350 = vmatprep.subr.mxu0 0.0
        %1351 = vmatpush1.msra.mxu0 0.0
        %1352 = vmatprep.subr.mxu0 0.0
        %1353 = vmatpush1.msra.mxu0 0.0
        %1354 = vmatprep.subr.mxu0 0.0
        %1355 = vmatpush1.msra.mxu0 0.0
        %1356 = vmatprep.subr.mxu0 0.0
        %1357 = vmatpush1.msra.mxu0 0.0
        %1358 = vmatprep.subr.mxu0 0.0
        %1359 = vmatpush1.msra.mxu0 0.0
        %1360 = vmatprep.subr.mxu0 0.0
        %1361 = vmatpush1.msra.mxu0 0.0
        %1362 = vmatprep.subr.mxu0 0.0
        %1363 = vmatpush1.msra.mxu0 0.0
        %1364 = vmatprep.subr.mxu0 0.0
        %v1365 = vand.u32 %v1248, 4294901760
        %v1366 = vsub.f32 %v1248, %v1365
        %v1367 = vand.u32 %v1366, 4294901760
        %v1368 = vsub.f32 %v1366, %v1367
        %v1369 = vand.u32 %v1368, 4294901760
        %1370 = vmatpush1.msra.mxu0 %v1369
        %1371 = vmatprep.subr.mxu0 0.0
        %v1372 = vand.u32 %v1247, 4294901760
        %v1373 = vsub.f32 %v1247, %v1372
        %v1374 = vand.u32 %v1373, 4294901760
        %v1375 = vsub.f32 %v1373, %v1374
        %v1376 = vand.u32 %v1375, 4294901760
        %1377 = vmatpush1.msra.mxu0 %v1376
        %1378 = vmatprep.subr.mxu0 0.0
        %1379 = vmatpush2.msra.mxu0 0.0
        %1380 = vmatprep.subr.mxu0 0.0
        %1381 = vmatpush2.msra.mxu0 0.0
        %1382 = vmatprep.subr.mxu0 0.0
        %1383 = vmatpush2.msra.mxu0 0.0
        %1384 = vmatprep.subr.mxu0 0.0
        %1385 = vmatpush2.msra.mxu0 0.0
        %1386 = vmatprep.subr.mxu0 0.0
        %1387 = vmatpush2.msra.mxu0 0.0
        %1388 = vmatprep.subr.mxu0 0.0
        %1389 = vmatpush2.msra.mxu0 0.0
        %1390 = vmatprep.subr.mxu0 0.0
        %1391 = vmatpush2.msra.mxu0 0.0
        %1392 = vmatprep.subr.mxu0 0.0
        %1393 = vmatpush2.msra.mxu0 0.0
        %1394 = vmatprep.subr.mxu0 0.0
        %1395 = vmatpush2.msra.mxu0 0.0
        %1396 = vmatprep.subr.mxu0 0.0
        %1397 = vmatpush2.msra.mxu0 0.0
        %1398 = vmatprep.subr.mxu0 0.0
        %1399 = vmatpush2.msra.mxu0 0.0
        %1400 = vmatprep.subr.mxu0 0.0
        %1401 = vmatpush2.msra.mxu0 0.0
        %1402 = vmatprep.subr.mxu0 0.0
        %1403 = vmatpush2.msra.mxu0 0.0
        %1404 = vmatprep.subr.mxu0 0.0
        %1405 = vmatpush2.msra.mxu0 0.0
        %1406 = vmatprep.subr.mxu0 0.0
        %1407 = vmatpush2.msra.mxu0 0.0
        %1408 = vmatprep.subr.mxu0 0.0
        %1409 = vmatpush2.msra.mxu0 0.0
        %1410 = vmatprep.mubr.f32.mxu0 0.0
        %v1411 = vand.u32 %v229, 4294901760
        %1412 = vmatmul.mubr.f32.gmra.mxu0 %v1411
        %v1413 = vpop.f32.mrf.mxu0
        %v1414 = vadd.f32 %v1323, %v1413
        %v1415 = vpop.f32.mrf.mxu0
        %1416 = vmatprep.mubr.f32.mxu0 0.0
        %v1417 = vand.u32 %v232, 4294901760
        %1418 = vmatmul.mubr.f32.gmra.mxu0 %v1417
        %v1419 = vpop.f32.mrf.mxu0
        %v1420 = vadd.f32 %v1333, %v1419
        %v1421 = vpop.f32.mrf.mxu0
        %1422 = vdwg.mxu0
        %1423 = vmatprep.subr.mxu0 0.0
        %1424 = vmatpush1.msra.mxu0 0.0
        %1425 = vmatprep.subr.mxu0 0.0
        %1426 = vmatpush1.msra.mxu0 0.0
        %1427 = vmatprep.subr.mxu0 0.0
        %1428 = vmatpush1.msra.mxu0 0.0
        %1429 = vmatprep.subr.mxu0 0.0
        %1430 = vmatpush1.msra.mxu0 0.0
        %1431 = vmatprep.subr.mxu0 0.0
        %1432 = vmatpush1.msra.mxu0 0.0
        %1433 = vmatprep.subr.mxu0 0.0
        %1434 = vmatpush1.msra.mxu0 0.0
        %1435 = vmatprep.subr.mxu0 0.0
        %1436 = vmatpush1.msra.mxu0 0.0
        %1437 = vmatprep.subr.mxu0 0.0
        %1438 = vmatpush1.msra.mxu0 0.0
        %1439 = vmatprep.subr.mxu0 0.0
        %1440 = vmatpush1.msra.mxu0 0.0
        %1441 = vmatprep.subr.mxu0 0.0
        %1442 = vmatpush1.msra.mxu0 0.0
        %1443 = vmatprep.subr.mxu0 0.0
        %1444 = vmatpush1.msra.mxu0 0.0
        %1445 = vmatprep.subr.mxu0 0.0
        %1446 = vmatpush1.msra.mxu0 0.0
        %1447 = vmatprep.subr.mxu0 0.0
        %1448 = vmatpush1.msra.mxu0 0.0
        %1449 = vmatprep.subr.mxu0 0.0
        %1450 = vmatpush1.msra.mxu0 0.0
        %1451 = vmatprep.subr.mxu0 0.0
        %v1452 = vand.u32 %v1248, 4294901760
        %v1453 = vsub.f32 %v1248, %v1452
        %1454 = vmatpush1.msra.mxu0 %v1453
        %1455 = vmatprep.subr.mxu0 0.0
        %v1456 = vand.u32 %v1247, 4294901760
        %v1457 = vsub.f32 %v1247, %v1456
        %1458 = vmatpush1.msra.mxu0 %v1457
        %1459 = vmatprep.subr.mxu0 0.0
        %1460 = vmatpush2.msra.mxu0 0.0
        %1461 = vmatprep.subr.mxu0 0.0
        %1462 = vmatpush2.msra.mxu0 0.0
        %1463 = vmatprep.subr.mxu0 0.0
        %1464 = vmatpush2.msra.mxu0 0.0
        %1465 = vmatprep.subr.mxu0 0.0
        %1466 = vmatpush2.msra.mxu0 0.0
        %1467 = vmatprep.subr.mxu0 0.0
        %1468 = vmatpush2.msra.mxu0 0.0
        %1469 = vmatprep.subr.mxu0 0.0
        %1470 = vmatpush2.msra.mxu0 0.0
        %1471 = vmatprep.subr.mxu0 0.0
        %1472 = vmatpush2.msra.mxu0 0.0
        %1473 = vmatprep.subr.mxu0 0.0
        %1474 = vmatpush2.msra.mxu0 0.0
        %1475 = vmatprep.subr.mxu0 0.0
        %1476 = vmatpush2.msra.mxu0 0.0
        %1477 = vmatprep.subr.mxu0 0.0
        %1478 = vmatpush2.msra.mxu0 0.0
        %1479 = vmatprep.subr.mxu0 0.0
        %1480 = vmatpush2.msra.mxu0 0.0
        %1481 = vmatprep.subr.mxu0 0.0
        %1482 = vmatpush2.msra.mxu0 0.0
        %1483 = vmatprep.subr.mxu0 0.0
        %1484 = vmatpush2.msra.mxu0 0.0
        %1485 = vmatprep.subr.mxu0 0.0
        %1486 = vmatpush2.msra.mxu0 0.0
        %1487 = vmatprep.subr.mxu0 0.0
        %1488 = vmatpush2.msra.mxu0 0.0
        %1489 = vmatprep.subr.mxu0 0.0
        %1490 = vmatpush2.msra.mxu0 0.0
        %1491 = vmatprep.mubr.f32.mxu0 0.0
        %v1492 = vand.u32 %v229, 4294901760
        %v1493 = vsub.f32 %v229, %v1492
        %1494 = vmatmul.mubr.f32.gmra.mxu0 %v1493
        %v1495 = vpop.f32.mrf.mxu0
        %v1496 = vadd.f32 %v1414, %v1495
        %v1497 = vpop.f32.mrf.mxu0
        %1498 = vmatprep.mubr.f32.mxu0 0.0
        %v1499 = vand.u32 %v232, 4294901760
        %v1500 = vsub.f32 %v232, %v1499
        %1501 = vmatmul.mubr.f32.gmra.mxu0 %v1500
        %v1502 = vpop.f32.mrf.mxu0
        %v1503 = vadd.f32 %v1420, %v1502
        %v1504 = vpop.f32.mrf.mxu0
        %1505 = vdwg.mxu0
        %1506 = vmatprep.subr.mxu0 0.0
        %1507 = vmatpush1.msra.mxu0 0.0
        %1508 = vmatprep.subr.mxu0 0.0
        %1509 = vmatpush1.msra.mxu0 0.0
        %1510 = vmatprep.subr.mxu0 0.0
        %1511 = vmatpush1.msra.mxu0 0.0
        %1512 = vmatprep.subr.mxu0 0.0
        %1513 = vmatpush1.msra.mxu0 0.0
        %1514 = vmatprep.subr.mxu0 0.0
        %1515 = vmatpush1.msra.mxu0 0.0
        %1516 = vmatprep.subr.mxu0 0.0
        %1517 = vmatpush1.msra.mxu0 0.0
        %1518 = vmatprep.subr.mxu0 0.0
        %1519 = vmatpush1.msra.mxu0 0.0
        %1520 = vmatprep.subr.mxu0 0.0
        %1521 = vmatpush1.msra.mxu0 0.0
        %1522 = vmatprep.subr.mxu0 0.0
        %1523 = vmatpush1.msra.mxu0 0.0
        %1524 = vmatprep.subr.mxu0 0.0
        %1525 = vmatpush1.msra.mxu0 0.0
        %1526 = vmatprep.subr.mxu0 0.0
        %1527 = vmatpush1.msra.mxu0 0.0
        %1528 = vmatprep.subr.mxu0 0.0
        %1529 = vmatpush1.msra.mxu0 0.0
        %1530 = vmatprep.subr.mxu0 0.0
        %1531 = vmatpush1.msra.mxu0 0.0
        %1532 = vmatprep.subr.mxu0 0.0
        %1533 = vmatpush1.msra.mxu0 0.0
        %1534 = vmatprep.subr.mxu0 0.0
        %v1535 = vand.u32 %v1248, 4294901760
        %1536 = vmatpush1.msra.mxu0 %v1535
        %1537 = vmatprep.subr.mxu0 0.0
        %v1538 = vand.u32 %v1247, 4294901760
        %1539 = vmatpush1.msra.mxu0 %v1538
        %1540 = vmatprep.subr.mxu0 0.0
        %1541 = vmatpush2.msra.mxu0 0.0
        %1542 = vmatprep.subr.mxu0 0.0
        %1543 = vmatpush2.msra.mxu0 0.0
        %1544 = vmatprep.subr.mxu0 0.0
        %1545 = vmatpush2.msra.mxu0 0.0
        %1546 = vmatprep.subr.mxu0 0.0
        %1547 = vmatpush2.msra.mxu0 0.0
        %1548 = vmatprep.subr.mxu0 0.0
        %1549 = vmatpush2.msra.mxu0 0.0
        %1550 = vmatprep.subr.mxu0 0.0
        %1551 = vmatpush2.msra.mxu0 0.0
        %1552 = vmatprep.subr.mxu0 0.0
        %1553 = vmatpush2.msra.mxu0 0.0
        %1554 = vmatprep.subr.mxu0 0.0
        %1555 = vmatpush2.msra.mxu0 0.0
        %1556 = vmatprep.subr.mxu0 0.0
        %1557 = vmatpush2.msra.mxu0 0.0
        %1558 = vmatprep.subr.mxu0 0.0
        %1559 = vmatpush2.msra.mxu0 0.0
        %1560 = vmatprep.subr.mxu0 0.0
        %1561 = vmatpush2.msra.mxu0 0.0
        %1562 = vmatprep.subr.mxu0 0.0
        %1563 = vmatpush2.msra.mxu0 0.0
        %1564 = vmatprep.subr.mxu0 0.0
        %1565 = vmatpush2.msra.mxu0 0.0
        %1566 = vmatprep.subr.mxu0 0.0
        %1567 = vmatpush2.msra.mxu0 0.0
        %1568 = vmatprep.subr.mxu0 0.0
        %1569 = vmatpush2.msra.mxu0 0.0
        %1570 = vmatprep.subr.mxu0 0.0
        %1571 = vmatpush2.msra.mxu0 0.0
        %1572 = vmatprep.mubr.f32.mxu0 0.0
        %v1573 = vand.u32 %v229, 4294901760
        %v1574 = vsub.f32 %v229, %v1573
        %v1575 = vand.u32 %v1574, 4294901760
        %1576 = vmatmul.mubr.f32.gmra.mxu0 %v1575
        %v1577 = vpop.f32.mrf.mxu0
        %v1578 = vadd.f32 %v1496, %v1577
        %v1579 = vpop.f32.mrf.mxu0
        %1580 = vmatprep.mubr.f32.mxu0 0.0
        %v1581 = vand.u32 %v232, 4294901760
        %v1582 = vsub.f32 %v232, %v1581
        %v1583 = vand.u32 %v1582, 4294901760
        %1584 = vmatmul.mubr.f32.gmra.mxu0 %v1583
        %v1585 = vpop.f32.mrf.mxu0
        %v1586 = vadd.f32 %v1503, %v1585
        %v1587 = vpop.f32.mrf.mxu0
        %1588 = vdwg.mxu0
        %1589 = vmatprep.subr.mxu0 0.0
        %1590 = vmatpush1.msra.mxu0 0.0
        %1591 = vmatprep.subr.mxu0 0.0
        %1592 = vmatpush1.msra.mxu0 0.0
        %1593 = vmatprep.subr.mxu0 0.0
        %1594 = vmatpush1.msra.mxu0 0.0
        %1595 = vmatprep.subr.mxu0 0.0
        %1596 = vmatpush1.msra.mxu0 0.0
        %1597 = vmatprep.subr.mxu0 0.0
        %1598 = vmatpush1.msra.mxu0 0.0
        %1599 = vmatprep.subr.mxu0 0.0
        %1600 = vmatpush1.msra.mxu0 0.0
        %1601 = vmatprep.subr.mxu0 0.0
        %1602 = vmatpush1.msra.mxu0 0.0
        %1603 = vmatprep.subr.mxu0 0.0
        %1604 = vmatpush1.msra.mxu0 0.0
        %1605 = vmatprep.subr.mxu0 0.0
        %1606 = vmatpush1.msra.mxu0 0.0
        %1607 = vmatprep.subr.mxu0 0.0
        %1608 = vmatpush1.msra.mxu0 0.0
        %1609 = vmatprep.subr.mxu0 0.0
        %1610 = vmatpush1.msra.mxu0 0.0
        %1611 = vmatprep.subr.mxu0 0.0
        %1612 = vmatpush1.msra.mxu0 0.0
        %1613 = vmatprep.subr.mxu0 0.0
        %1614 = vmatpush1.msra.mxu0 0.0
        %1615 = vmatprep.subr.mxu0 0.0
        %1616 = vmatpush1.msra.mxu0 0.0
        %1617 = vmatprep.subr.mxu0 0.0
        %v1618 = vand.u32 %v1248, 4294901760
        %v1619 = vsub.f32 %v1248, %v1618
        %v1620 = vand.u32 %v1619, 4294901760
        %1621 = vmatpush1.msra.mxu0 %v1620
        %1622 = vmatprep.subr.mxu0 0.0
        %v1623 = vand.u32 %v1247, 4294901760
        %v1624 = vsub.f32 %v1247, %v1623
        %v1625 = vand.u32 %v1624, 4294901760
        %1626 = vmatpush1.msra.mxu0 %v1625
        %1627 = vmatprep.subr.mxu0 0.0
        %1628 = vmatpush2.msra.mxu0 0.0
        %1629 = vmatprep.subr.mxu0 0.0
        %1630 = vmatpush2.msra.mxu0 0.0
        %1631 = vmatprep.subr.mxu0 0.0
        %1632 = vmatpush2.msra.mxu0 0.0
        %1633 = vmatprep.subr.mxu0 0.0
        %1634 = vmatpush2.msra.mxu0 0.0
        %1635 = vmatprep.subr.mxu0 0.0
        %1636 = vmatpush2.msra.mxu0 0.0
        %1637 = vmatprep.subr.mxu0 0.0
        %1638 = vmatpush2.msra.mxu0 0.0
        %1639 = vmatprep.subr.mxu0 0.0
        %1640 = vmatpush2.msra.mxu0 0.0
        %1641 = vmatprep.subr.mxu0 0.0
        %1642 = vmatpush2.msra.mxu0 0.0
        %1643 = vmatprep.subr.mxu0 0.0
        %1644 = vmatpush2.msra.mxu0 0.0
        %1645 = vmatprep.subr.mxu0 0.0
        %1646 = vmatpush2.msra.mxu0 0.0
        %1647 = vmatprep.subr.mxu0 0.0
        %1648 = vmatpush2.msra.mxu0 0.0
        %1649 = vmatprep.subr.mxu0 0.0
        %1650 = vmatpush2.msra.mxu0 0.0
        %1651 = vmatprep.subr.mxu0 0.0
        %1652 = vmatpush2.msra.mxu0 0.0
        %1653 = vmatprep.subr.mxu0 0.0
        %1654 = vmatpush2.msra.mxu0 0.0
        %1655 = vmatprep.subr.mxu0 0.0
        %1656 = vmatpush2.msra.mxu0 0.0
        %1657 = vmatprep.subr.mxu0 0.0
        %1658 = vmatpush2.msra.mxu0 0.0
        %1659 = vmatprep.mubr.f32.mxu0 0.0
        %v1660 = vand.u32 %v229, 4294901760
        %1661 = vmatmul.mubr.f32.gmra.mxu0 %v1660
        %v1662 = vpop.f32.mrf.mxu0
        %v1663 = vadd.f32 %v1578, %v1662
        %v1664 = vpop.f32.mrf.mxu0
        %1665 = vmatprep.mubr.f32.mxu0 0.0
        %v1666 = vand.u32 %v232, 4294901760
        %1667 = vmatmul.mubr.f32.gmra.mxu0 %v1666
        %v1668 = vpop.f32.mrf.mxu0
        %v1669 = vadd.f32 %v1586, %v1668
        %v1670 = vpop.f32.mrf.mxu0
        %1671 = vdwg.mxu0
        %1672 = vmatprep.subr.mxu0 0.0
        %1673 = vmatpush1.msra.mxu0 0.0
        %1674 = vmatprep.subr.mxu0 0.0
        %1675 = vmatpush1.msra.mxu0 0.0
        %1676 = vmatprep.subr.mxu0 0.0
        %1677 = vmatpush1.msra.mxu0 0.0
        %1678 = vmatprep.subr.mxu0 0.0
        %1679 = vmatpush1.msra.mxu0 0.0
        %1680 = vmatprep.subr.mxu0 0.0
        %1681 = vmatpush1.msra.mxu0 0.0
        %1682 = vmatprep.subr.mxu0 0.0
        %1683 = vmatpush1.msra.mxu0 0.0
        %1684 = vmatprep.subr.mxu0 0.0
        %1685 = vmatpush1.msra.mxu0 0.0
        %1686 = vmatprep.subr.mxu0 0.0
        %1687 = vmatpush1.msra.mxu0 0.0
        %1688 = vmatprep.subr.mxu0 0.0
        %1689 = vmatpush1.msra.mxu0 0.0
        %1690 = vmatprep.subr.mxu0 0.0
        %1691 = vmatpush1.msra.mxu0 0.0
        %1692 = vmatprep.subr.mxu0 0.0
        %1693 = vmatpush1.msra.mxu0 0.0
        %1694 = vmatprep.subr.mxu0 0.0
        %1695 = vmatpush1.msra.mxu0 0.0
        %1696 = vmatprep.subr.mxu0 0.0
        %1697 = vmatpush1.msra.mxu0 0.0
        %1698 = vmatprep.subr.mxu0 0.0
        %1699 = vmatpush1.msra.mxu0 0.0
        %1700 = vmatprep.subr.mxu0 0.0
        %v1701 = vand.u32 %v1248, 4294901760
        %1702 = vmatpush1.msra.mxu0 %v1701
        %1703 = vmatprep.subr.mxu0 0.0
        %v1704 = vand.u32 %v1247, 4294901760
        %1705 = vmatpush1.msra.mxu0 %v1704
        %1706 = vmatprep.subr.mxu0 0.0
        %1707 = vmatpush2.msra.mxu0 0.0
        %1708 = vmatprep.subr.mxu0 0.0
        %1709 = vmatpush2.msra.mxu0 0.0
        %1710 = vmatprep.subr.mxu0 0.0
        %1711 = vmatpush2.msra.mxu0 0.0
        %1712 = vmatprep.subr.mxu0 0.0
        %1713 = vmatpush2.msra.mxu0 0.0
        %1714 = vmatprep.subr.mxu0 0.0
        %1715 = vmatpush2.msra.mxu0 0.0
        %1716 = vmatprep.subr.mxu0 0.0
        %1717 = vmatpush2.msra.mxu0 0.0
        %1718 = vmatprep.subr.mxu0 0.0
        %1719 = vmatpush2.msra.mxu0 0.0
        %1720 = vmatprep.subr.mxu0 0.0
        %1721 = vmatpush2.msra.mxu0 0.0
        %1722 = vmatprep.subr.mxu0 0.0
        %1723 = vmatpush2.msra.mxu0 0.0
        %1724 = vmatprep.subr.mxu0 0.0
        %1725 = vmatpush2.msra.mxu0 0.0
        %1726 = vmatprep.subr.mxu0 0.0
        %1727 = vmatpush2.msra.mxu0 0.0
        %1728 = vmatprep.subr.mxu0 0.0
        %1729 = vmatpush2.msra.mxu0 0.0
        %1730 = vmatprep.subr.mxu0 0.0
        %1731 = vmatpush2.msra.mxu0 0.0
        %1732 = vmatprep.subr.mxu0 0.0
        %1733 = vmatpush2.msra.mxu0 0.0
        %1734 = vmatprep.subr.mxu0 0.0
        %1735 = vmatpush2.msra.mxu0 0.0
        %1736 = vmatprep.subr.mxu0 0.0
        %1737 = vmatpush2.msra.mxu0 0.0
        %1738 = vmatprep.mubr.f32.mxu0 0.0
        %v1739 = vand.u32 %v229, 4294901760
        %1740 = vmatmul.mubr.f32.gmra.mxu0 %v1739
        %v1741 = vpop.f32.mrf.mxu0
        %v1742 = vadd.f32 %v1663, %v1741
        %v1743 = vpop.f32.mrf.mxu0
        %1744 = vmatprep.mubr.f32.mxu0 0.0
        %v1745 = vand.u32 %v232, 4294901760
        %1746 = vmatmul.mubr.f32.gmra.mxu0 %v1745
        %v1747 = vpop.f32.mrf.mxu0
        %v1748 = vadd.f32 %v1669, %v1747
        %v1749 = vpop.f32.mrf.mxu0
        %1750 = vdwg.mxu0
        %v1752 = vsel %vm227, %v1742, 0
        %v1755 = vsel %vm227, %v1748, 0
        %1757 = vmatprep.subr.mxu0 0.0
        %1758 = vmatpush1.msra.mxu0 0.0
        %1759 = vmatprep.subr.mxu0 0.0
        %1760 = vmatpush1.msra.mxu0 0.0
        %1761 = vmatprep.subr.mxu0 0.0
        %1762 = vmatpush1.msra.mxu0 0.0
        %1763 = vmatprep.subr.mxu0 0.0
        %1764 = vmatpush1.msra.mxu0 0.0
        %1765 = vmatprep.subr.mxu0 0.0
        %1766 = vmatpush1.msra.mxu0 0.0
        %1767 = vmatprep.subr.mxu0 0.0
        %1768 = vmatpush1.msra.mxu0 0.0
        %1769 = vmatprep.subr.mxu0 0.0
        %1770 = vmatpush1.msra.mxu0 0.0
        %1771 = vmatprep.subr.mxu0 0.0
        %1772 = vmatpush1.msra.mxu0 0.0
        %1773 = vmatprep.subr.mxu0 0.0
        %1774 = vmatpush1.msra.mxu0 0.0
        %1775 = vmatprep.subr.mxu0 0.0
        %1776 = vmatpush1.msra.mxu0 0.0
        %1777 = vmatprep.subr.mxu0 0.0
        %1778 = vmatpush1.msra.mxu0 0.0
        %1779 = vmatprep.subr.mxu0 0.0
        %1780 = vmatpush1.msra.mxu0 0.0
        %1781 = vmatprep.subr.mxu0 0.0
        %1782 = vmatpush1.msra.mxu0 0.0
        %1783 = vmatprep.subr.mxu0 0.0
        %1784 = vmatpush1.msra.mxu0 0.0
        %1785 = vmatprep.subr.mxu0 0.0
        %v1786 = vand.u32 %v224, 4294901760
        %1787 = vmatpush1.msra.mxu0 %v1786
        %1788 = vmatprep.subr.mxu0 0.0
        %v1789 = vand.u32 %v223, 4294901760
        %1790 = vmatpush1.msra.mxu0 %v1789
        %1791 = vmatprep.subr.mxu0 0.0
        %1792 = vmatpush2.msra.mxu0 0.0
        %1793 = vmatprep.subr.mxu0 0.0
        %1794 = vmatpush2.msra.mxu0 0.0
        %1795 = vmatprep.subr.mxu0 0.0
        %1796 = vmatpush2.msra.mxu0 0.0
        %1797 = vmatprep.subr.mxu0 0.0
        %1798 = vmatpush2.msra.mxu0 0.0
        %1799 = vmatprep.subr.mxu0 0.0
        %1800 = vmatpush2.msra.mxu0 0.0
        %1801 = vmatprep.subr.mxu0 0.0
        %1802 = vmatpush2.msra.mxu0 0.0
        %1803 = vmatprep.subr.mxu0 0.0
        %1804 = vmatpush2.msra.mxu0 0.0
        %1805 = vmatprep.subr.mxu0 0.0
        %1806 = vmatpush2.msra.mxu0 0.0
        %1807 = vmatprep.subr.mxu0 0.0
        %1808 = vmatpush2.msra.mxu0 0.0
        %1809 = vmatprep.subr.mxu0 0.0
        %1810 = vmatpush2.msra.mxu0 0.0
        %1811 = vmatprep.subr.mxu0 0.0
        %1812 = vmatpush2.msra.mxu0 0.0
        %1813 = vmatprep.subr.mxu0 0.0
        %1814 = vmatpush2.msra.mxu0 0.0
        %1815 = vmatprep.subr.mxu0 0.0
        %1816 = vmatpush2.msra.mxu0 0.0
        %1817 = vmatprep.subr.mxu0 0.0
        %1818 = vmatpush2.msra.mxu0 0.0
        %1819 = vmatprep.subr.mxu0 0.0
        %1820 = vmatpush2.msra.mxu0 0.0
        %1821 = vmatprep.subr.mxu0 0.0
        %1822 = vmatpush2.msra.mxu0 0.0
        %1823 = vmatprep.mubr.f32.mxu0 0.0
        %v1824 = vand.u32 %v1752, 4294901760
        %v1825 = vsub.f32 %v1752, %v1824
        %v1826 = vand.u32 %v1825, 4294901760
        %v1827 = vsub.f32 %v1825, %v1826
        %v1828 = vand.u32 %v1827, 4294901760
        %1829 = vmatmul.mubr.f32.gmra.mxu0 %v1828
        %v1830 = vpop.f32.mrf.mxu0
        %v1831 = vadd.f32 0.0, %v1830
        %v1832 = vpop.f32.mrf.mxu0
        %1833 = vmatprep.mubr.f32.mxu0 0.0
        %v1834 = vand.u32 %v1755, 4294901760
        %v1835 = vsub.f32 %v1755, %v1834
        %v1836 = vand.u32 %v1835, 4294901760
        %v1837 = vsub.f32 %v1835, %v1836
        %v1838 = vand.u32 %v1837, 4294901760
        %1839 = vmatmul.mubr.f32.gmra.mxu0 %v1838
        %v1840 = vpop.f32.mrf.mxu0
        %v1841 = vadd.f32 0.0, %v1840
        %v1842 = vpop.f32.mrf.mxu0
        %1843 = vdwg.mxu0
        %1844 = vmatprep.subr.mxu0 0.0
        %1845 = vmatpush1.msra.mxu0 0.0
        %1846 = vmatprep.subr.mxu0 0.0
        %1847 = vmatpush1.msra.mxu0 0.0
        %1848 = vmatprep.subr.mxu0 0.0
        %1849 = vmatpush1.msra.mxu0 0.0
        %1850 = vmatprep.subr.mxu0 0.0
        %1851 = vmatpush1.msra.mxu0 0.0
        %1852 = vmatprep.subr.mxu0 0.0
        %1853 = vmatpush1.msra.mxu0 0.0
        %1854 = vmatprep.subr.mxu0 0.0
        %1855 = vmatpush1.msra.mxu0 0.0
        %1856 = vmatprep.subr.mxu0 0.0
        %1857 = vmatpush1.msra.mxu0 0.0
        %1858 = vmatprep.subr.mxu0 0.0
        %1859 = vmatpush1.msra.mxu0 0.0
        %1860 = vmatprep.subr.mxu0 0.0
        %1861 = vmatpush1.msra.mxu0 0.0
        %1862 = vmatprep.subr.mxu0 0.0
        %1863 = vmatpush1.msra.mxu0 0.0
        %1864 = vmatprep.subr.mxu0 0.0
        %1865 = vmatpush1.msra.mxu0 0.0
        %1866 = vmatprep.subr.mxu0 0.0
        %1867 = vmatpush1.msra.mxu0 0.0
        %1868 = vmatprep.subr.mxu0 0.0
        %1869 = vmatpush1.msra.mxu0 0.0
        %1870 = vmatprep.subr.mxu0 0.0
        %1871 = vmatpush1.msra.mxu0 0.0
        %1872 = vmatprep.subr.mxu0 0.0
        %v1873 = vand.u32 %v224, 4294901760
        %v1874 = vsub.f32 %v224, %v1873
        %v1875 = vand.u32 %v1874, 4294901760
        %v1876 = vsub.f32 %v1874, %v1875
        %v1877 = vand.u32 %v1876, 4294901760
        %1878 = vmatpush1.msra.mxu0 %v1877
        %1879 = vmatprep.subr.mxu0 0.0
        %v1880 = vand.u32 %v223, 4294901760
        %v1881 = vsub.f32 %v223, %v1880
        %v1882 = vand.u32 %v1881, 4294901760
        %v1883 = vsub.f32 %v1881, %v1882
        %v1884 = vand.u32 %v1883, 4294901760
        %1885 = vmatpush1.msra.mxu0 %v1884
        %1886 = vmatprep.subr.mxu0 0.0
        %1887 = vmatpush2.msra.mxu0 0.0
        %1888 = vmatprep.subr.mxu0 0.0
        %1889 = vmatpush2.msra.mxu0 0.0
        %1890 = vmatprep.subr.mxu0 0.0
        %1891 = vmatpush2.msra.mxu0 0.0
        %1892 = vmatprep.subr.mxu0 0.0
        %1893 = vmatpush2.msra.mxu0 0.0
        %1894 = vmatprep.subr.mxu0 0.0
        %1895 = vmatpush2.msra.mxu0 0.0
        %1896 = vmatprep.subr.mxu0 0.0
        %1897 = vmatpush2.msra.mxu0 0.0
        %1898 = vmatprep.subr.mxu0 0.0
        %1899 = vmatpush2.msra.mxu0 0.0
        %1900 = vmatprep.subr.mxu0 0.0
        %1901 = vmatpush2.msra.mxu0 0.0
        %1902 = vmatprep.subr.mxu0 0.0
        %1903 = vmatpush2.msra.mxu0 0.0
        %1904 = vmatprep.subr.mxu0 0.0
        %1905 = vmatpush2.msra.mxu0 0.0
        %1906 = vmatprep.subr.mxu0 0.0
        %1907 = vmatpush2.msra.mxu0 0.0
        %1908 = vmatprep.subr.mxu0 0.0
        %1909 = vmatpush2.msra.mxu0 0.0
        %1910 = vmatprep.subr.mxu0 0.0
        %1911 = vmatpush2.msra.mxu0 0.0
        %1912 = vmatprep.subr.mxu0 0.0
        %1913 = vmatpush2.msra.mxu0 0.0
        %1914 = vmatprep.subr.mxu0 0.0
        %1915 = vmatpush2.msra.mxu0 0.0
        %1916 = vmatprep.subr.mxu0 0.0
        %1917 = vmatpush2.msra.mxu0 0.0
        %1918 = vmatprep.mubr.f32.mxu0 0.0
        %v1919 = vand.u32 %v1752, 4294901760
        %1920 = vmatmul.mubr.f32.gmra.mxu0 %v1919
        %v1921 = vpop.f32.mrf.mxu0
        %v1922 = vadd.f32 %v1831, %v1921
        %v1923 = vpop.f32.mrf.mxu0
        %1924 = vmatprep.mubr.f32.mxu0 0.0
        %v1925 = vand.u32 %v1755, 4294901760
        %1926 = vmatmul.mubr.f32.gmra.mxu0 %v1925
        %v1927 = vpop.f32.mrf.mxu0
        %v1928 = vadd.f32 %v1841, %v1927
        %v1929 = vpop.f32.mrf.mxu0
        %1930 = vdwg.mxu0
        %1931 = vmatprep.subr.mxu0 0.0
        %1932 = vmatpush1.msra.mxu0 0.0
        %1933 = vmatprep.subr.mxu0 0.0
        %1934 = vmatpush1.msra.mxu0 0.0
        %1935 = vmatprep.subr.mxu0 0.0
        %1936 = vmatpush1.msra.mxu0 0.0
        %1937 = vmatprep.subr.mxu0 0.0
        %1938 = vmatpush1.msra.mxu0 0.0
        %1939 = vmatprep.subr.mxu0 0.0
        %1940 = vmatpush1.msra.mxu0 0.0
        %1941 = vmatprep.subr.mxu0 0.0
        %1942 = vmatpush1.msra.mxu0 0.0
        %1943 = vmatprep.subr.mxu0 0.0
        %1944 = vmatpush1.msra.mxu0 0.0
        %1945 = vmatprep.subr.mxu0 0.0
        %1946 = vmatpush1.msra.mxu0 0.0
        %1947 = vmatprep.subr.mxu0 0.0
        %1948 = vmatpush1.msra.mxu0 0.0
        %1949 = vmatprep.subr.mxu0 0.0
        %1950 = vmatpush1.msra.mxu0 0.0
        %1951 = vmatprep.subr.mxu0 0.0
        %1952 = vmatpush1.msra.mxu0 0.0
        %1953 = vmatprep.subr.mxu0 0.0
        %1954 = vmatpush1.msra.mxu0 0.0
        %1955 = vmatprep.subr.mxu0 0.0
        %1956 = vmatpush1.msra.mxu0 0.0
        %1957 = vmatprep.subr.mxu0 0.0
        %1958 = vmatpush1.msra.mxu0 0.0
        %1959 = vmatprep.subr.mxu0 0.0
        %v1960 = vand.u32 %v224, 4294901760
        %v1961 = vsub.f32 %v224, %v1960
        %1962 = vmatpush1.msra.mxu0 %v1961
        %1963 = vmatprep.subr.mxu0 0.0
        %v1964 = vand.u32 %v223, 4294901760
        %v1965 = vsub.f32 %v223, %v1964
        %1966 = vmatpush1.msra.mxu0 %v1965
        %1967 = vmatprep.subr.mxu0 0.0
        %1968 = vmatpush2.msra.mxu0 0.0
        %1969 = vmatprep.subr.mxu0 0.0
        %1970 = vmatpush2.msra.mxu0 0.0
        %1971 = vmatprep.subr.mxu0 0.0
        %1972 = vmatpush2.msra.mxu0 0.0
        %1973 = vmatprep.subr.mxu0 0.0
        %1974 = vmatpush2.msra.mxu0 0.0
        %1975 = vmatprep.subr.mxu0 0.0
        %1976 = vmatpush2.msra.mxu0 0.0
        %1977 = vmatprep.subr.mxu0 0.0
        %1978 = vmatpush2.msra.mxu0 0.0
        %1979 = vmatprep.subr.mxu0 0.0
        %1980 = vmatpush2.msra.mxu0 0.0
        %1981 = vmatprep.subr.mxu0 0.0
        %1982 = vmatpush2.msra.mxu0 0.0
        %1983 = vmatprep.subr.mxu0 0.0
        %1984 = vmatpush2.msra.mxu0 0.0
        %1985 = vmatprep.subr.mxu0 0.0
        %1986 = vmatpush2.msra.mxu0 0.0
        %1987 = vmatprep.subr.mxu0 0.0
        %1988 = vmatpush2.msra.mxu0 0.0
        %1989 = vmatprep.subr.mxu0 0.0
        %1990 = vmatpush2.msra.mxu0 0.0
        %1991 = vmatprep.subr.mxu0 0.0
        %1992 = vmatpush2.msra.mxu0 0.0
        %1993 = vmatprep.subr.mxu0 0.0
        %1994 = vmatpush2.msra.mxu0 0.0
        %1995 = vmatprep.subr.mxu0 0.0
        %1996 = vmatpush2.msra.mxu0 0.0
        %1997 = vmatprep.subr.mxu0 0.0
        %1998 = vmatpush2.msra.mxu0 0.0
        %1999 = vmatprep.mubr.f32.mxu0 0.0
        %v2000 = vand.u32 %v1752, 4294901760
        %v2001 = vsub.f32 %v1752, %v2000
        %2002 = vmatmul.mubr.f32.gmra.mxu0 %v2001
        %v2003 = vpop.f32.mrf.mxu0
        %v2004 = vadd.f32 %v1922, %v2003
        %v2005 = vpop.f32.mrf.mxu0
        %2006 = vmatprep.mubr.f32.mxu0 0.0
        %v2007 = vand.u32 %v1755, 4294901760
        %v2008 = vsub.f32 %v1755, %v2007
        %2009 = vmatmul.mubr.f32.gmra.mxu0 %v2008
        %v2010 = vpop.f32.mrf.mxu0
        %v2011 = vadd.f32 %v1928, %v2010
        %v2012 = vpop.f32.mrf.mxu0
        %2013 = vdwg.mxu0
        %2014 = vmatprep.subr.mxu0 0.0
        %2015 = vmatpush1.msra.mxu0 0.0
        %2016 = vmatprep.subr.mxu0 0.0
        %2017 = vmatpush1.msra.mxu0 0.0
        %2018 = vmatprep.subr.mxu0 0.0
        %2019 = vmatpush1.msra.mxu0 0.0
        %2020 = vmatprep.subr.mxu0 0.0
        %2021 = vmatpush1.msra.mxu0 0.0
        %2022 = vmatprep.subr.mxu0 0.0
        %2023 = vmatpush1.msra.mxu0 0.0
        %2024 = vmatprep.subr.mxu0 0.0
        %2025 = vmatpush1.msra.mxu0 0.0
        %2026 = vmatprep.subr.mxu0 0.0
        %2027 = vmatpush1.msra.mxu0 0.0
        %2028 = vmatprep.subr.mxu0 0.0
        %2029 = vmatpush1.msra.mxu0 0.0
        %2030 = vmatprep.subr.mxu0 0.0
        %2031 = vmatpush1.msra.mxu0 0.0
        %2032 = vmatprep.subr.mxu0 0.0
        %2033 = vmatpush1.msra.mxu0 0.0
        %2034 = vmatprep.subr.mxu0 0.0
        %2035 = vmatpush1.msra.mxu0 0.0
        %2036 = vmatprep.subr.mxu0 0.0
        %2037 = vmatpush1.msra.mxu0 0.0
        %2038 = vmatprep.subr.mxu0 0.0
        %2039 = vmatpush1.msra.mxu0 0.0
        %2040 = vmatprep.subr.mxu0 0.0
        %2041 = vmatpush1.msra.mxu0 0.0
        %2042 = vmatprep.subr.mxu0 0.0
        %v2043 = vand.u32 %v224, 4294901760
        %2044 = vmatpush1.msra.mxu0 %v2043
        %2045 = vmatprep.subr.mxu0 0.0
        %v2046 = vand.u32 %v223, 4294901760
        %2047 = vmatpush1.msra.mxu0 %v2046
        %2048 = vmatprep.subr.mxu0 0.0
        %2049 = vmatpush2.msra.mxu0 0.0
        %2050 = vmatprep.subr.mxu0 0.0
        %2051 = vmatpush2.msra.mxu0 0.0
        %2052 = vmatprep.subr.mxu0 0.0
        %2053 = vmatpush2.msra.mxu0 0.0
        %2054 = vmatprep.subr.mxu0 0.0
        %2055 = vmatpush2.msra.mxu0 0.0
        %2056 = vmatprep.subr.mxu0 0.0
        %2057 = vmatpush2.msra.mxu0 0.0
        %2058 = vmatprep.subr.mxu0 0.0
        %2059 = vmatpush2.msra.mxu0 0.0
        %2060 = vmatprep.subr.mxu0 0.0
        %2061 = vmatpush2.msra.mxu0 0.0
        %2062 = vmatprep.subr.mxu0 0.0
        %2063 = vmatpush2.msra.mxu0 0.0
        %2064 = vmatprep.subr.mxu0 0.0
        %2065 = vmatpush2.msra.mxu0 0.0
        %2066 = vmatprep.subr.mxu0 0.0
        %2067 = vmatpush2.msra.mxu0 0.0
        %2068 = vmatprep.subr.mxu0 0.0
        %2069 = vmatpush2.msra.mxu0 0.0
        %2070 = vmatprep.subr.mxu0 0.0
        %2071 = vmatpush2.msra.mxu0 0.0
        %2072 = vmatprep.subr.mxu0 0.0
        %2073 = vmatpush2.msra.mxu0 0.0
        %2074 = vmatprep.subr.mxu0 0.0
        %2075 = vmatpush2.msra.mxu0 0.0
        %2076 = vmatprep.subr.mxu0 0.0
        %2077 = vmatpush2.msra.mxu0 0.0
        %2078 = vmatprep.subr.mxu0 0.0
        %2079 = vmatpush2.msra.mxu0 0.0
        %2080 = vmatprep.mubr.f32.mxu0 0.0
        %v2081 = vand.u32 %v1752, 4294901760
        %v2082 = vsub.f32 %v1752, %v2081
        %v2083 = vand.u32 %v2082, 4294901760
        %2084 = vmatmul.mubr.f32.gmra.mxu0 %v2083
        %v2085 = vpop.f32.mrf.mxu0
        %v2086 = vadd.f32 %v2004, %v2085
        %v2087 = vpop.f32.mrf.mxu0
        %2088 = vmatprep.mubr.f32.mxu0 0.0
        %v2089 = vand.u32 %v1755, 4294901760
        %v2090 = vsub.f32 %v1755, %v2089
        %v2091 = vand.u32 %v2090, 4294901760
        %2092 = vmatmul.mubr.f32.gmra.mxu0 %v2091
        %v2093 = vpop.f32.mrf.mxu0
        %v2094 = vadd.f32 %v2011, %v2093
        %v2095 = vpop.f32.mrf.mxu0
        %2096 = vdwg.mxu0
        %2097 = vmatprep.subr.mxu0 0.0
        %2098 = vmatpush1.msra.mxu0 0.0
        %2099 = vmatprep.subr.mxu0 0.0
        %2100 = vmatpush1.msra.mxu0 0.0
        %2101 = vmatprep.subr.mxu0 0.0
        %2102 = vmatpush1.msra.mxu0 0.0
        %2103 = vmatprep.subr.mxu0 0.0
        %2104 = vmatpush1.msra.mxu0 0.0
        %2105 = vmatprep.subr.mxu0 0.0
        %2106 = vmatpush1.msra.mxu0 0.0
        %2107 = vmatprep.subr.mxu0 0.0
        %2108 = vmatpush1.msra.mxu0 0.0
        %2109 = vmatprep.subr.mxu0 0.0
        %2110 = vmatpush1.msra.mxu0 0.0
        %2111 = vmatprep.subr.mxu0 0.0
        %2112 = vmatpush1.msra.mxu0 0.0
        %2113 = vmatprep.subr.mxu0 0.0
        %2114 = vmatpush1.msra.mxu0 0.0
        %2115 = vmatprep.subr.mxu0 0.0
        %2116 = vmatpush1.msra.mxu0 0.0
        %2117 = vmatprep.subr.mxu0 0.0
        %2118 = vmatpush1.msra.mxu0 0.0
        %2119 = vmatprep.subr.mxu0 0.0
        %2120 = vmatpush1.msra.mxu0 0.0
        %2121 = vmatprep.subr.mxu0 0.0
        %2122 = vmatpush1.msra.mxu0 0.0
        %2123 = vmatprep.subr.mxu0 0.0
        %2124 = vmatpush1.msra.mxu0 0.0
        %2125 = vmatprep.subr.mxu0 0.0
        %v2126 = vand.u32 %v224, 4294901760
        %v2127 = vsub.f32 %v224, %v2126
        %v2128 = vand.u32 %v2127, 4294901760
        %2129 = vmatpush1.msra.mxu0 %v2128
        %2130 = vmatprep.subr.mxu0 0.0
        %v2131 = vand.u32 %v223, 4294901760
        %v2132 = vsub.f32 %v223, %v2131
        %v2133 = vand.u32 %v2132, 4294901760
        %2134 = vmatpush1.msra.mxu0 %v2133
        %2135 = vmatprep.subr.mxu0 0.0
        %2136 = vmatpush2.msra.mxu0 0.0
        %2137 = vmatprep.subr.mxu0 0.0
        %2138 = vmatpush2.msra.mxu0 0.0
        %2139 = vmatprep.subr.mxu0 0.0
        %2140 = vmatpush2.msra.mxu0 0.0
        %2141 = vmatprep.subr.mxu0 0.0
        %2142 = vmatpush2.msra.mxu0 0.0
        %2143 = vmatprep.subr.mxu0 0.0
        %2144 = vmatpush2.msra.mxu0 0.0
        %2145 = vmatprep.subr.mxu0 0.0
        %2146 = vmatpush2.msra.mxu0 0.0
        %2147 = vmatprep.subr.mxu0 0.0
        %2148 = vmatpush2.msra.mxu0 0.0
        %2149 = vmatprep.subr.mxu0 0.0
        %2150 = vmatpush2.msra.mxu0 0.0
        %2151 = vmatprep.subr.mxu0 0.0
        %2152 = vmatpush2.msra.mxu0 0.0
        %2153 = vmatprep.subr.mxu0 0.0
        %2154 = vmatpush2.msra.mxu0 0.0
        %2155 = vmatprep.subr.mxu0 0.0
        %2156 = vmatpush2.msra.mxu0 0.0
        %2157 = vmatprep.subr.mxu0 0.0
        %2158 = vmatpush2.msra.mxu0 0.0
        %2159 = vmatprep.subr.mxu0 0.0
        %2160 = vmatpush2.msra.mxu0 0.0
        %2161 = vmatprep.subr.mxu0 0.0
        %2162 = vmatpush2.msra.mxu0 0.0
        %2163 = vmatprep.subr.mxu0 0.0
        %2164 = vmatpush2.msra.mxu0 0.0
        %2165 = vmatprep.subr.mxu0 0.0
        %2166 = vmatpush2.msra.mxu0 0.0
        %2167 = vmatprep.mubr.f32.mxu0 0.0
        %v2168 = vand.u32 %v1752, 4294901760
        %2169 = vmatmul.mubr.f32.gmra.mxu0 %v2168
        %v2170 = vpop.f32.mrf.mxu0
        %v2171 = vadd.f32 %v2086, %v2170
        %v2172 = vpop.f32.mrf.mxu0
        %2173 = vmatprep.mubr.f32.mxu0 0.0
        %v2174 = vand.u32 %v1755, 4294901760
        %2175 = vmatmul.mubr.f32.gmra.mxu0 %v2174
        %v2176 = vpop.f32.mrf.mxu0
        %v2177 = vadd.f32 %v2094, %v2176
        %v2178 = vpop.f32.mrf.mxu0
        %2179 = vdwg.mxu0
        %2180 = vmatprep.subr.mxu0 0.0
        %2181 = vmatpush1.msra.mxu0 0.0
        %2182 = vmatprep.subr.mxu0 0.0
        %2183 = vmatpush1.msra.mxu0 0.0
        %2184 = vmatprep.subr.mxu0 0.0
        %2185 = vmatpush1.msra.mxu0 0.0
        %2186 = vmatprep.subr.mxu0 0.0
        %2187 = vmatpush1.msra.mxu0 0.0
        %2188 = vmatprep.subr.mxu0 0.0
        %2189 = vmatpush1.msra.mxu0 0.0
        %2190 = vmatprep.subr.mxu0 0.0
        %2191 = vmatpush1.msra.mxu0 0.0
        %2192 = vmatprep.subr.mxu0 0.0
        %2193 = vmatpush1.msra.mxu0 0.0
        %2194 = vmatprep.subr.mxu0 0.0
        %2195 = vmatpush1.msra.mxu0 0.0
        %2196 = vmatprep.subr.mxu0 0.0
        %2197 = vmatpush1.msra.mxu0 0.0
        %2198 = vmatprep.subr.mxu0 0.0
        %2199 = vmatpush1.msra.mxu0 0.0
        %2200 = vmatprep.subr.mxu0 0.0
        %2201 = vmatpush1.msra.mxu0 0.0
        %2202 = vmatprep.subr.mxu0 0.0
        %2203 = vmatpush1.msra.mxu0 0.0
        %2204 = vmatprep.subr.mxu0 0.0
        %2205 = vmatpush1.msra.mxu0 0.0
        %2206 = vmatprep.subr.mxu0 0.0
        %2207 = vmatpush1.msra.mxu0 0.0
        %2208 = vmatprep.subr.mxu0 0.0
        %v2209 = vand.u32 %v224, 4294901760
        %2210 = vmatpush1.msra.mxu0 %v2209
        %2211 = vmatprep.subr.mxu0 0.0
        %v2212 = vand.u32 %v223, 4294901760
        %2213 = vmatpush1.msra.mxu0 %v2212
        %2214 = vmatprep.subr.mxu0 0.0
        %2215 = vmatpush2.msra.mxu0 0.0
        %2216 = vmatprep.subr.mxu0 0.0
        %2217 = vmatpush2.msra.mxu0 0.0
        %2218 = vmatprep.subr.mxu0 0.0
        %2219 = vmatpush2.msra.mxu0 0.0
        %2220 = vmatprep.subr.mxu0 0.0
        %2221 = vmatpush2.msra.mxu0 0.0
        %2222 = vmatprep.subr.mxu0 0.0
        %2223 = vmatpush2.msra.mxu0 0.0
        %2224 = vmatprep.subr.mxu0 0.0
        %2225 = vmatpush2.msra.mxu0 0.0
        %2226 = vmatprep.subr.mxu0 0.0
        %2227 = vmatpush2.msra.mxu0 0.0
        %2228 = vmatprep.subr.mxu0 0.0
        %2229 = vmatpush2.msra.mxu0 0.0
        %2230 = vmatprep.subr.mxu0 0.0
        %2231 = vmatpush2.msra.mxu0 0.0
        %2232 = vmatprep.subr.mxu0 0.0
        %2233 = vmatpush2.msra.mxu0 0.0
        %2234 = vmatprep.subr.mxu0 0.0
        %2235 = vmatpush2.msra.mxu0 0.0
        %2236 = vmatprep.subr.mxu0 0.0
        %2237 = vmatpush2.msra.mxu0 0.0
        %2238 = vmatprep.subr.mxu0 0.0
        %2239 = vmatpush2.msra.mxu0 0.0
        %2240 = vmatprep.subr.mxu0 0.0
        %2241 = vmatpush2.msra.mxu0 0.0
        %2242 = vmatprep.subr.mxu0 0.0
        %2243 = vmatpush2.msra.mxu0 0.0
        %2244 = vmatprep.subr.mxu0 0.0
        %2245 = vmatpush2.msra.mxu0 0.0
        %2246 = vmatprep.mubr.f32.mxu0 0.0
        %v2247 = vand.u32 %v1752, 4294901760
        %2248 = vmatmul.mubr.f32.gmra.mxu0 %v2247
        %v2249 = vpop.f32.mrf.mxu0
        %v2250 = vadd.f32 %v2171, %v2249
        %v2251 = vpop.f32.mrf.mxu0
        %2252 = vmatprep.mubr.f32.mxu0 0.0
        %v2253 = vand.u32 %v1755, 4294901760
        %2254 = vmatmul.mubr.f32.gmra.mxu0 %v2253
        %v2255 = vpop.f32.mrf.mxu0
        %v2256 = vadd.f32 %v2177, %v2255
        %v2257 = vpop.f32.mrf.mxu0
        %2258 = vdwg.mxu0
        %s2259 = scalar_lea.vmem %s218, 16 [#allocation8]
        %2260 = vst.msk [vmem:[%s2259] sm:$0xff] %vm227, %v2250
        %2261 = vst.msk [vmem:[%s2259 + $0x8] sm:$0xff] %vm227, %v2256
        %s2262 = sand.u32 %s97, 1
        %s2263 = scalar_lea.sflag [#allocation4], %s2262
        %s2264 = sand.u32 %s97, 1
        %s2265 = smul.addr %s2264, 32
        %s2266 = scalar_lea.vmem [#allocation8], %s2265
        // Predicated region
        $region45: #{tpu_custom_call.1} parent=31 // pred_check
          %p2267 = pneg %p107
        $region46: #{tpu_custom_call.1} parent=31 // pred_check_branch
          %2269 = sbr.rel (%p2267) target = $region48
        $region47: #{tpu_custom_call.1} parent=31 // pred_region
          %s2270 = smul.u32 2, %s21
          %s2272 = ssub.s32 512, 512
          %2273 = vsyncadd %s2263, %s2272
          %s2274 = smul.addr %s2270, 2
          %s2275 = smul.addr %s2274, 128
          %s2276 = scalar_lea.hbm %s3, %s2275
          %s2277 = sshll.u32 %s2266, 4
          %s2278 = int_to_ptr.vmem [resolvable:$true] %s2277
          %2283 = dma.vmem_to_hbm [thread:$0]  %s2278, 512, %s2276, %s2263, 128, 128, 8
        $region48: #{tpu_custom_call.1} parent=31 // pred_fallthru
          _
      $region32: #{tpu_custom_call.1} parent=5 // pred_fallthru
        _
      %p2284 = scmp.le.s32.totalorder 2, %s16
      // Predicated region
      $region49: #{tpu_custom_call.1} parent=5 // pred_check
        %p2285 = pneg %p2284
      $region50: #{tpu_custom_call.1} parent=5 // pred_check_branch
        %2287 = sbr.rel (%p2285) target = $region52
      $region51: #{tpu_custom_call.1} parent=5 // pred_region
        %s2288 = ssub.s32 %s16, 2
        // Predicated region
        $region53: #{tpu_custom_call.1} parent=51 // pred_check
          %p2289 = pneg %p113
        $region54: #{tpu_custom_call.1} parent=51 // pred_check_branch
          %2291 = sbr.rel (%p2289) target = $region56
        $region55: #{tpu_custom_call.1} parent=51 // pred_region
          %s2292 = sand.u32 %s98, 1
          %s2293 = scalar_lea.sflag [#allocation4], %s2292
          %s2294 = sand.u32 %s98, 1
          %s2295 = smul.addr %s2294, 32
          %s2296 = scalar_lea.vmem [#allocation8], %s2295
          %2297 = dma.done %s2293, 512
        $region56: #{tpu_custom_call.1} parent=51 // pred_fallthru
          _
      $region52: #{tpu_custom_call.1} parent=5 // pred_fallthru
        _
    $region6: #{tpu_custom_call.1} parent=1 // loop_footer
      %s20 = sadd.s32 1, %s16
    $region7: #{tpu_custom_call.1} parent=1 // loop_footer_branch
      %15 = sbr.rel target = $region3
    $region8: #{tpu_custom_call.1} parent=1 // loop_exit
      _
    %2298 = vsyncpa [#allocation3], 1
    %s2299 = scalar_lea.sflag [#allocation3], 1
    %2300 = vsyncpa %s2299, 1
    %2301 = vsyncpa [#allocation6], 1
    %2302 = vsyncpa [#allocation4], 1
    %s2303 = scalar_lea.sflag [#allocation4], 1
    %2304 = vsyncpa %s2303, 1

</llo_original>
